<compile_context>
chip_gen: v7x
topology: tpu7x:2x2x1
jax: 0.10.0
libtpu: 0.0.40
codegen_flags: <defaults>
</compile_context>

<pallas_src>
import functools

import jax
import jax.numpy as jnp
from jax.experimental import pallas as pl
from jax.experimental.pallas import tpu as pltpu


def _fused_kernel(x_ref, w1t_ref, b1_ref, w2pt_ref, off_ref, o_ref, *, exp_dtype):
    # x_ref   : (D_in, tile_T)  frames of one batch element (channel-first)
    # w1t_ref : (C, D_in)       recog weight, transposed
    # b1_ref  : (C, 1)          recog bias (column, f32)
    # w2pt_ref: (D_out, C)      gen weight (posterior part), transposed
    # off_ref : (D_out, 1)      per-batch speaker offset = spcode @ w2s + b2 (f32)
    # o_ref   : (D_out, tile_T)

    # --- recog_model: logits (C, tile_T), f32 accumulation on the MXU ---
    logits = (
        jnp.dot(w1t_ref[...], x_ref[...], preferred_element_type=jnp.float32)
        + b1_ref[...]
    )

    # --- softmax over the class dim (PyTorch dim=1 == axis 0 here) ---
    # Normalization is deferred past the second matmul (exact: denom is per-column).
    m = jnp.max(logits, axis=0, keepdims=True)                       # f32
    e = jnp.exp((logits - m).astype(exp_dtype))                      # EUP; bf16 on v6e/v7x
    denom = jnp.sum(e.astype(jnp.float32), axis=0, keepdims=True)    # (1, tile_T) f32

    # --- gen_model (posterior part) on the un-normalized exponentials ---
    y_un = jnp.dot(
        w2pt_ref[...],
        e.astype(w2pt_ref.dtype),
        preferred_element_type=jnp.float32,
    )  # (D_out, tile_T)

    inv = pl.reciprocal(denom, approx=True)                          # EUP slot, ~free
    o_ref[...] = (y_un * inv + off_ref[...]).astype(o_ref.dtype)


def _vmem_capacity_bytes():
    try:
        return int(pltpu.get_tpu_info().vmem_capacity_bytes)
    except Exception:
        return 64 << 20  # conservative default: v7x per-TensorCore VMEM


def _bf16_eup_ok():
    # bf16 exp only where the EUP/VPU have a bf16 path (v6e / v7x); never on v5e or older.
    try:
        kind = jax.devices()[0].device_kind.lower()
    except Exception:
        return False
    for bad in ("v2", "v3", "v4", "v5"):
        if bad in kind:
            return False
    return True


def _step_vmem_bytes(tile_t, d_in, c, d_out, in_bytes, out_bytes):
    """Rough per-grid-step VMEM footprint (f32 upper bound for intermediates)."""
    stream = 2 * (d_in * tile_t * in_bytes) + 2 * (d_out * tile_t * out_bytes)
    interm = (2 * c + 2 * d_out + 4) * tile_t * 4
    weights = 2 * (c * d_in + c + d_out * c + d_out) * 4
    return stream + interm + weights


def speech_recog_gen_multi(
    x_bct, spcode, params, *, tile_t=None, compute_dtype=None, out_dtype=None
):
    """x_bct: (B, D_in, T) channel-first; spcode: (B, S). Returns (B, D_out, T).

    Compute dtype follows x (pass bf16 x for the fast mem-bound path); MXU
    accumulation and softmax statistics stay f32.
    """
    w1t, b1, w2pt, w2s, b2 = (
        params["w1t"], params["b1"], params["w2pt"], params["w2s"], params["b2"]
    )
    B, D_in, T = x_bct.shape
    C = w1t.shape[0]
    D_out = w2pt.shape[0]

    cdt = jnp.dtype(compute_dtype) if compute_dtype is not None else x_bct.dtype
    odt = jnp.dtype(out_dtype) if out_dtype is not None else x_bct.dtype
    in_bytes = jnp.dtype(cdt).itemsize
    out_bytes = jnp.dtype(odt).itemsize

    # --- generation-aware frame-tile selection ---
    cap = _vmem_capacity_bytes()
    budget = cap // 2  # headroom for double-buffering + compiler scratch
    if tile_t is None:
        fitting = [
            cand
            for cand in (2048, 1024, 512, 256, 128)
            if T % cand == 0
            and _step_vmem_bytes(cand, D_in, C, D_out, in_bytes, out_bytes) <= budget
        ]
        MIN_TOTAL_STEPS = 8  # keep the pipeline (and both v7x cores) busy
        for cand in fitting:  # descending: largest tile that keeps enough steps
            if B * (T // cand) >= MIN_TOTAL_STEPS:
                tile_t = cand
                break
        if tile_t is None:
            # No candidate gives enough steps: take the smallest fitting tile
            # (max steps); if nothing divides T, fall back to full T
            # (masked partial stores, unbounded footprint — guard upstream).
            tile_t = fitting[-1] if fitting else T
    n_t = T // tile_t

    footprint = _step_vmem_bytes(tile_t, D_in, C, D_out, in_bytes, out_bytes)
    vmem_limit = int(min(cap * 3 // 4, max(2 * footprint, 32 << 20)))

    exp_dtype = (
        jnp.bfloat16
        if (cdt == jnp.dtype(jnp.bfloat16) and _bf16_eup_ok())
        else jnp.float32
    )

    # Inputs for the kernel (astype is a no-op when the caller already hands in bf16).
    x_c = x_bct if x_bct.dtype == cdt else x_bct.astype(cdt)
    w1t_c = w1t.astype(cdt)
    w2pt_c = w2pt.astype(cdt)
    b1_col = b1.reshape(C, 1).astype(jnp.float32)

    # Speaker path hoisted out of the kernel (constant per batch element).
    gen_off = (
        jnp.dot(spcode.astype(jnp.float32), w2s.astype(jnp.float32))
        + b2.astype(jnp.float32)
    ).reshape(B, D_out, 1)

    kernel = functools.partial(_fused_kernel, exp_dtype=exp_dtype)

    def _call(single_buffer_weights):
        def w_spec(shape, imap):
            if single_buffer_weights:
                return pl.BlockSpec(shape, imap, pipeline_mode=pl.Buffered(1))
            return pl.BlockSpec(shape, imap)

        return pl.pallas_call(
            kernel,
            out_shape=jax.ShapeDtypeStruct((B, D_out, T), odt),
            grid_spec=pltpu.PrefetchScalarGridSpec(
                num_scalar_prefetch=0,
                grid=(B, n_t),
                in_specs=[
                    pl.BlockSpec((None, D_in, tile_t), lambda b, t: (b, 0, t)),  # x tile (streamed)
                    w_spec((C, D_in), lambda b, t: (0, 0)),                      # w1^T
                    w_spec((C, 1), lambda b, t: (0, 0)),                         # b1
                    w_spec((D_out, C), lambda b, t: (0, 0)),                     # w2p^T
                    w_spec((None, D_out, 1), lambda b, t: (b, 0, 0)),            # speaker offset
                ],
                out_specs=pl.BlockSpec((None, D_out, tile_t), lambda b, t: (b, 0, t)),
            ),
            compiler_params=pltpu.CompilerParams(
                dimension_semantics=("parallel", "parallel"),
                vmem_limit_bytes=vmem_limit,
            ),
        )(x_c, w1t_c, b1_col, w2pt_c, gen_off)

    if hasattr(pl, "Buffered"):
        try:
            return _call(True)
        except Exception:
            pass  # fall back to default (double) buffering for the weight streams
    return _call(False)


def _reference(x_bct, spcode, params):
    """Pure-JAX reference mirroring the PyTorch forward semantics (all f32)."""
    w1t, b1, w2pt, w2s, b2 = (
        params["w1t"], params["b1"], params["w2pt"], params["w2s"], params["b2"]
    )
    logits = jnp.einsum("cd,bdt->bct", w1t, x_bct) + b1[None, :, None]
    post = jax.nn.softmax(logits, axis=1)  # softmax over dim=1
    y = (
        jnp.einsum("oc,bct->bot", w2pt, post)
        + jnp.dot(spcode, w2s)[:, :, None]
        + b2[None, :, None]
    )
    return y


if __name__ == "__main__":
    B, D_in, T, C, S, D_out = 2, 32, 512, 64, 8, 32

    key = jax.random.PRNGKey(0)
    k_x, k_sp, k_w1, k_b1, k_w2p, k_w2s, k_b2 = jax.random.split(key, 7)

    x = jax.random.normal(k_x, (B, D_in, T), dtype=jnp.float32)
    spcode = jax.random.normal(k_sp, (B, S), dtype=jnp.float32)

    params = {
        "w1t": jax.random.normal(k_w1, (C, D_in), dtype=jnp.float32) * 0.1,
        "b1": jax.random.normal(k_b1, (C,), dtype=jnp.float32) * 0.1,
        "w2pt": jax.random.normal(k_w2p, (D_out, C), dtype=jnp.float32) * 0.1,
        "w2s": jax.random.normal(k_w2s, (S, D_out), dtype=jnp.float32) * 0.1,
        "b2": jax.random.normal(k_b2, (D_out,), dtype=jnp.float32) * 0.1,
    }

    ref = _reference(x, spcode, params)

    # f32 path (only the approx reciprocal differs from the reference).
    out = jax.block_until_ready(speech_recog_gen_multi(x, spcode, params))
    assert out.shape == (B, D_out, T)
    assert jnp.allclose(out, ref, atol=2e-3, rtol=2e-3)

    # bf16 I/O path: caller hands in bf16 x (wrapper cast is a no-op); MXU
    # accumulation and softmax stats stay f32; expect the looser tolerance.
    out_bf16 = jax.block_until_ready(
        speech_recog_gen_multi(x.astype(jnp.bfloat16), spcode, params)
    )
    assert out_bf16.shape == (B, D_out, T)
    assert jnp.allclose(out_bf16.astype(jnp.float32), ref, atol=5e-2, rtol=5e-2)

    print("KERNEL_OK")
</pallas_src>

<mosaic_0001>
module attributes {stable_mosaic.version = 11 : i64} {
  func.func @_fused_kernel(%arg0: i32, %arg1: i32, %arg2: memref<1x32x128xf32, #tpu.memory_space<vmem>>, %arg3: memref<64x32xf32, #tpu.memory_space<vmem>>, %arg4: memref<64x1xf32, #tpu.memory_space<vmem>>, %arg5: memref<32x64xf32, #tpu.memory_space<vmem>>, %arg6: memref<1x32x1xf32, #tpu.memory_space<vmem>>, %arg7: memref<1x32x128xf32, #tpu.memory_space<vmem>>) attributes {dimension_semantics = [#tpu.dimension_semantics<parallel>, #tpu.dimension_semantics<parallel>], iteration_bounds = array<i64: 2, 4>, scalar_prefetch = 0 : i64, scratch_operands = 0 : i64, tpu.core_type = #tpu.core_type<tc>, window_params = [{transform_indices = @transform_0, window_bounds = array<i64: 1, 32, 128>}, {pipeline_mode = #tpu.pipeline_mode<synchronous>, transform_indices = @transform_1, window_bounds = array<i64: 64, 32>}, {pipeline_mode = #tpu.pipeline_mode<synchronous>, transform_indices = @transform_2, window_bounds = array<i64: 64, 1>}, {pipeline_mode = #tpu.pipeline_mode<synchronous>, transform_indices = @transform_3, window_bounds = array<i64: 32, 64>}, {pipeline_mode = #tpu.pipeline_mode<synchronous>, transform_indices = @transform_4, window_bounds = array<i64: 1, 32, 1>}, {transform_indices = @transform_5, window_bounds = array<i64: 1, 32, 128>}]} {
    %c0 = arith.constant 0 : index
    %c0_0 = arith.constant 0 : index
    %0 = vector.load %arg3[%c0, %c0_0] : memref<64x32xf32, #tpu.memory_space<vmem>>, vector<64x32xf32>
    %c0_1 = arith.constant 0 : index
    %c0_2 = arith.constant 0 : index
    %c0_3 = arith.constant 0 : index
    %1 = vector.load %arg2[%c0_1, %c0_2, %c0_3] : memref<1x32x128xf32, #tpu.memory_space<vmem>>, vector<1x32x128xf32>
    %2 = vector.shape_cast %1 : vector<1x32x128xf32> to vector<32x128xf32>
    %cst = arith.constant dense<0.000000e+00> : vector<64x128xf32>
    %3 = tpu.matmul %0, %2, %cst {dimension_numbers = #tpu.dot_dimension_numbers<[1], [0], [0], [1], [0, 0, 1, 1], [], []>} : vector<64x32xf32>, vector<32x128xf32>, vector<64x128xf32> -> vector<64x128xf32>
    %c0_4 = arith.constant 0 : index
    %c0_5 = arith.constant 0 : index
    %4 = vector.load %arg4[%c0_4, %c0_5] : memref<64x1xf32, #tpu.memory_space<vmem>>, vector<64x1xf32>
    %5 = vector.broadcast %4 : vector<64x1xf32> to vector<64x128xf32>
    %6 = arith.addf %3, %5 : vector<64x128xf32>
    %cst_6 = arith.constant dense<0xFF800000> : vector<128xf32>
    %7 = vector.multi_reduction <maximumf>, %6, %cst_6 [0] : vector<64x128xf32> to vector<128xf32>
    %8 = vector.shape_cast %7 : vector<128xf32> to vector<1x128xf32>
    %9 = vector.broadcast %8 : vector<1x128xf32> to vector<64x128xf32>
    %10 = arith.subf %6, %9 : vector<64x128xf32>
    %11 = math.exp %10 : vector<64x128xf32>
    %cst_7 = arith.constant dense<0.000000e+00> : vector<128xf32>
    %12 = vector.multi_reduction <add>, %11, %cst_7 [0] : vector<64x128xf32> to vector<128xf32>
    %13 = vector.shape_cast %12 : vector<128xf32> to vector<1x128xf32>
    %c0_8 = arith.constant 0 : index
    %c0_9 = arith.constant 0 : index
    %14 = vector.load %arg5[%c0_8, %c0_9] : memref<32x64xf32, #tpu.memory_space<vmem>>, vector<32x64xf32>
    %cst_10 = arith.constant dense<0.000000e+00> : vector<32x128xf32>
    %15 = tpu.matmul %14, %11, %cst_10 {dimension_numbers = #tpu.dot_dimension_numbers<[1], [0], [0], [1], [0, 0, 1, 1], [], []>} : vector<32x64xf32>, vector<64x128xf32>, vector<32x128xf32> -> vector<32x128xf32>
    %16 = tpu.reciprocal %13 {approx = true} : vector<1x128xf32> -> vector<1x128xf32>
    %17 = vector.broadcast %16 : vector<1x128xf32> to vector<32x128xf32>
    %18 = arith.mulf %15, %17 : vector<32x128xf32>
    %c0_11 = arith.constant 0 : index
    %c0_12 = arith.constant 0 : index
    %c0_13 = arith.constant 0 : index
    %19 = vector.load %arg6[%c0_11, %c0_12, %c0_13] : memref<1x32x1xf32, #tpu.memory_space<vmem>>, vector<1x32x1xf32>
    %20 = vector.shape_cast %19 : vector<1x32x1xf32> to vector<32x1xf32>
    %21 = vector.broadcast %20 : vector<32x1xf32> to vector<32x128xf32>
    %22 = arith.addf %18, %21 : vector<32x128xf32>
    %c0_14 = arith.constant 0 : index
    %c0_15 = arith.constant 0 : index
    %c0_16 = arith.constant 0 : index
    %23 = vector.load %arg7[%c0_14, %c0_15, %c0_16] : memref<1x32x128xf32, #tpu.memory_space<vmem>>, vector<1x32x128xf32>
    %24 = vector.shape_cast %23 : vector<1x32x128xf32> to vector<32x128xf32>
    %25 = vector.shape_cast %22 : vector<32x128xf32> to vector<1x32x128xf32>
    tpu.vector_store %arg7[%c0_14, %c0_15, %c0_16], %25 {strides = array<i32>} : memref<1x32x128xf32, #tpu.memory_space<vmem>>, vector<1x32x128xf32>,
    return
  }
  func.func @transform_0(%arg0: i32, %arg1: i32) -> (i32, i32, i32) {
    %c0_i32 = arith.constant 0 : i32
    %c0_i32_0 = arith.constant 0 : i32
    return %arg0, %c0_i32, %arg1 : i32, i32, i32
  }
  func.func @transform_1(%arg0: i32, %arg1: i32) -> (i32, i32) {
    %c0_i32 = arith.constant 0 : i32
    %c0_i32_0 = arith.constant 0 : i32
    %c0_i32_1 = arith.constant 0 : i32
    return %c0_i32, %c0_i32_0 : i32, i32
  }
  func.func @transform_2(%arg0: i32, %arg1: i32) -> (i32, i32) {
    %c0_i32 = arith.constant 0 : i32
    %c0_i32_0 = arith.constant 0 : i32
    %c0_i32_1 = arith.constant 0 : i32
    return %c0_i32, %c0_i32_0 : i32, i32
  }
  func.func @transform_3(%arg0: i32, %arg1: i32) -> (i32, i32) {
    %c0_i32 = arith.constant 0 : i32
    %c0_i32_0 = arith.constant 0 : i32
    %c0_i32_1 = arith.constant 0 : i32
    return %c0_i32, %c0_i32_0 : i32, i32
  }
  func.func @transform_4(%arg0: i32, %arg1: i32) -> (i32, i32, i32) {
    %c0_i32 = arith.constant 0 : i32
    %c0_i32_0 = arith.constant 0 : i32
    %c0_i32_1 = arith.constant 0 : i32
    return %arg0, %c0_i32, %c0_i32_0 : i32, i32, i32
  }
  func.func @transform_5(%arg0: i32, %arg1: i32) -> (i32, i32, i32) {
    %c0_i32 = arith.constant 0 : i32
    %c0_i32_0 = arith.constant 0 : i32
    return %arg0, %c0_i32, %arg1 : i32, i32, i32
  }
}

module attributes {stable_mosaic.version = 11 : i64} {
  func.func @_fused_kernel(%arg0: i32, %arg1: i32, %arg2: memref<1x32x128xf32, #tpu.memory_space<vmem>>, %arg3: memref<64x32xf32, #tpu.memory_space<vmem>>, %arg4: memref<64x1xf32, #tpu.memory_space<vmem>>, %arg5: memref<32x64xf32, #tpu.memory_space<vmem>>, %arg6: memref<1x32x1xf32, #tpu.memory_space<vmem>>, %arg7: memref<1x32x128xf32, #tpu.memory_space<vmem>>) attributes {dimension_semantics = [#tpu.dimension_semantics<parallel>, #tpu.dimension_semantics<parallel>], iteration_bounds = array<i64: 2, 4>, scalar_prefetch = 0 : i64, scratch_operands = 0 : i64, tpu.core_type = #tpu.core_type<tc>, window_params = [{transform_indices = @transform_0, window_bounds = array<i64: 1, 32, 128>}, {pipeline_mode = #tpu.pipeline_mode<synchronous>, transform_indices = @transform_1, window_bounds = array<i64: 64, 32>}, {pipeline_mode = #tpu.pipeline_mode<synchronous>, transform_indices = @transform_2, window_bounds = array<i64: 64, 1>}, {pipeline_mode = #tpu.pipeline_mode<synchronous>, transform_indices = @transform_3, window_bounds = array<i64: 32, 64>}, {transform_indices = @transform_4, window_bounds = array<i64: 1, 32, 1>}, {transform_indices = @transform_5, window_bounds = array<i64: 1, 32, 128>}]} {
    %c0 = arith.constant 0 : index
    %c0_0 = arith.constant 0 : index
    %0 = vector.load %arg3[%c0, %c0_0] : memref<64x32xf32, #tpu.memory_space<vmem>>, vector<64x32xf32>
    %c0_1 = arith.constant 0 : index
    %c0_2 = arith.constant 0 : index
    %c0_3 = arith.constant 0 : index
    %1 = vector.load %arg2[%c0_1, %c0_2, %c0_3] : memref<1x32x128xf32, #tpu.memory_space<vmem>>, vector<1x32x128xf32>
    %2 = vector.shape_cast %1 : vector<1x32x128xf32> to vector<32x128xf32>
    %cst = arith.constant dense<0.000000e+00> : vector<64x128xf32>
    %3 = tpu.matmul %0, %2, %cst {dimension_numbers = #tpu.dot_dimension_numbers<[1], [0], [0], [1], [0, 0, 1, 1], [], []>} : vector<64x32xf32>, vector<32x128xf32>, vector<64x128xf32> -> vector<64x128xf32>
    %c0_4 = arith.constant 0 : index
    %c0_5 = arith.constant 0 : index
    %4 = vector.load %arg4[%c0_4, %c0_5] : memref<64x1xf32, #tpu.memory_space<vmem>>, vector<64x1xf32>
    %5 = vector.broadcast %4 : vector<64x1xf32> to vector<64x128xf32>
    %6 = arith.addf %3, %5 : vector<64x128xf32>
    %cst_6 = arith.constant dense<0xFF800000> : vector<128xf32>
    %7 = vector.multi_reduction <maximumf>, %6, %cst_6 [0] : vector<64x128xf32> to vector<128xf32>
    %8 = vector.shape_cast %7 : vector<128xf32> to vector<1x128xf32>
    %9 = vector.broadcast %8 : vector<1x128xf32> to vector<64x128xf32>
    %10 = arith.subf %6, %9 : vector<64x128xf32>
    %11 = math.exp %10 : vector<64x128xf32>
    %cst_7 = arith.constant dense<0.000000e+00> : vector<128xf32>
    %12 = vector.multi_reduction <add>, %11, %cst_7 [0] : vector<64x128xf32> to vector<128xf32>
    %13 = vector.shape_cast %12 : vector<128xf32> to vector<1x128xf32>
    %c0_8 = arith.constant 0 : index
    %c0_9 = arith.constant 0 : index
    %14 = vector.load %arg5[%c0_8, %c0_9] : memref<32x64xf32, #tpu.memory_space<vmem>>, vector<32x64xf32>
    %cst_10 = arith.constant dense<0.000000e+00> : vector<32x128xf32>
    %15 = tpu.matmul %14, %11, %cst_10 {dimension_numbers = #tpu.dot_dimension_numbers<[1], [0], [0], [1], [0, 0, 1, 1], [], []>} : vector<32x64xf32>, vector<64x128xf32>, vector<32x128xf32> -> vector<32x128xf32>
    %16 = tpu.reciprocal %13 {approx = true} : vector<1x128xf32> -> vector<1x128xf32>
    %17 = vector.broadcast %16 : vector<1x128xf32> to vector<32x128xf32>
    %18 = arith.mulf %15, %17 : vector<32x128xf32>
    %c0_11 = arith.constant 0 : index
    %c0_12 = arith.constant 0 : index
    %c0_13 = arith.constant 0 : index
    %19 = vector.load %arg6[%c0_11, %c0_12, %c0_13] : memref<1x32x1xf32, #tpu.memory_space<vmem>>, vector<1x32x1xf32>
    %20 = vector.shape_cast %19 : vector<1x32x1xf32> to vector<32x1xf32>
    %21 = vector.broadcast %20 : vector<32x1xf32> to vector<32x128xf32>
    %22 = arith.addf %18, %21 : vector<32x128xf32>
    %c0_14 = arith.constant 0 : index
    %c0_15 = arith.constant 0 : index
    %c0_16 = arith.constant 0 : index
    %23 = vector.load %arg7[%c0_14, %c0_15, %c0_16] : memref<1x32x128xf32, #tpu.memory_space<vmem>>, vector<1x32x128xf32>
    %24 = vector.shape_cast %23 : vector<1x32x128xf32> to vector<32x128xf32>
    %25 = vector.shape_cast %22 : vector<32x128xf32> to vector<1x32x128xf32>
    tpu.vector_store %arg7[%c0_14, %c0_15, %c0_16], %25 {strides = array<i32>} : memref<1x32x128xf32, #tpu.memory_space<vmem>>, vector<1x32x128xf32>,
    return
  }
  func.func @transform_0(%arg0: i32, %arg1: i32) -> (i32, i32, i32) {
    %c0_i32 = arith.constant 0 : i32
    %c0_i32_0 = arith.constant 0 : i32
    return %arg0, %c0_i32, %arg1 : i32, i32, i32
  }
  func.func @transform_1(%arg0: i32, %arg1: i32) -> (i32, i32) {
    %c0_i32 = arith.constant 0 : i32
    %c0_i32_0 = arith.constant 0 : i32
    %c0_i32_1 = arith.constant 0 : i32
    return %c0_i32, %c0_i32_0 : i32, i32
  }
  func.func @transform_2(%arg0: i32, %arg1: i32) -> (i32, i32) {
    %c0_i32 = arith.constant 0 : i32
    %c0_i32_0 = arith.constant 0 : i32
    %c0_i32_1 = arith.constant 0 : i32
    return %c0_i32, %c0_i32_0 : i32, i32
  }
  func.func @transform_3(%arg0: i32, %arg1: i32) -> (i32, i32) {
    %c0_i32 = arith.constant 0 : i32
    %c0_i32_0 = arith.constant 0 : i32
    %c0_i32_1 = arith.constant 0 : i32
    return %c0_i32, %c0_i32_0 : i32, i32
  }
  func.func @transform_4(%arg0: i32, %arg1: i32) -> (i32, i32, i32) {
    %c0_i32 = arith.constant 0 : i32
    %c0_i32_0 = arith.constant 0 : i32
    %c0_i32_1 = arith.constant 0 : i32
    return %arg0, %c0_i32, %c0_i32_0 : i32, i32, i32
  }
  func.func @transform_5(%arg0: i32, %arg1: i32) -> (i32, i32, i32) {
    %c0_i32 = arith.constant 0 : i32
    %c0_i32_0 = arith.constant 0 : i32
    return %arg0, %c0_i32, %arg1 : i32, i32, i32
  }
}

</mosaic_0001>

<llo_original>
// kernel: tpu_custom_call.1
$region0: #{tpu_custom_call.1}
  #allocation0 [shape = 'u32[]', space=smem, size = 0x4, offset = 0x4, fixed_abs, tag = 'smem constant byte address 0x4 - core index']
  #allocation1 [shape = 'u32[144,128]{1,0:T(1,128)}', space=vmem, size = 0x12000, scoped, tag = 'internal scratch']
  %s0 = inlined_call_operand.hbm [shape: f32[2,32,512], index: 0, kind: input, shape index: {}]
  %s1 = inlined_call_operand.vmem [shape: f32[64,32], index: 1, kind: input, shape index: {}]
  %s2 = inlined_call_operand.vmem [shape: f32[64,1], index: 2, kind: input, shape index: {}]
  %s3 = inlined_call_operand.vmem [shape: f32[32,64], index: 3, kind: input, shape index: {}]
  %s4 = inlined_call_operand.vmem [shape: f32[2,32,1], index: 4, kind: input, shape index: {}]
  %s5 = inlined_call_operand.hbm [shape: f32[2,32,512], index: 5, kind: output, shape index: {}]
  %s6 = sld [smem:[#allocation0]]
  $region57: #{tpu_custom_call.1} parent=0
    _
  %s8 = ssub.s32 1, %s6
  %s9 = scalar_select 0, %s8, %s6
  $region1: #{tpu_custom_call.1} parent=0
    #allocation2 [shape = 'u8[32768]{0}', space=vmem, size = 0x8000, scoped, tag = 'input window, operand 0']
    #allocation3 [shape = 's32[2]{0}', space=sflag, size = 0x8, scoped, tag = 'scoped memory for tpu_custom_call.1']
    #allocation4 [shape = 's32[2]{0}', space=sflag, size = 0x8, scoped, tag = 'scoped memory for tpu_custom_call.1']
    #allocation5 [shape = 'u8[32768]{0}', space=vmem, size = 0x8000, scoped, tag = 'output window, operand 0']
    %10 = vsyncpa [#allocation3], 0
    %s11 = scalar_lea.sflag [#allocation3], 1
    %12 = vsyncpa %s11, 0
    %13 = vsyncpa [#allocation4], 0
    %s14 = scalar_lea.sflag [#allocation4], 1
    %15 = vsyncpa %s14, 0
    loop: start=0, step=1, limit=10
    $region2: #{tpu_custom_call.1} parent=1 // loop_pre_header
      _
    $region3: #{tpu_custom_call.1} parent=1 // loop_header
      %s17 = sphi 0, %s21
      %p18 = scmp.ge.s32.totalorder %s17, 10
      %s24 = sphi 0, %s36
      %s25 = sphi 0, %s32
      %s26 = sphi 0, %s24
      %s27 = sphi 0, %s25
      %s28 = sphi 0, %s26
      %s29 = sphi 0, %s27
      %s41 = sphi 0, %s43
      %s44 = sphi 0, %s41
      %s45 = sphi 0, %s44
      %s61 = sphi 0, %s45
      %s65 = sphi 0, %s65
      %s67 = sphi 0, %s65
      %s68 = sphi 0, %s67
      %s82 = sphi 0, %s68
      %s86 = sphi 0, %s86
      %s88 = sphi 0, %s86
      %s89 = sphi 0, %s88
      %s103 = sphi 0, %s89
      %s107 = sphi 0, %s107
      %s109 = sphi 0, %s107
      %s110 = sphi 0, %s109
      %s124 = sphi 0, %s110
      %s130 = sphi 0, %s132
      %s133 = sphi 0, %s130
      %s134 = sphi 0, %s133
      %s150 = sphi 0, %s134
      %s158 = sphi 0, %s160
      %s161 = sphi 0, %s158
      %s162 = sphi 0, %s161
      %s178 = sphi 0, %s162
    $region4: #{tpu_custom_call.1} parent=1 // loop_header_branch
      %20 = sbr.rel (%p18) target = $region8
    $region5: #{tpu_custom_call.1} parent=1 // loop_body
      %s22 = ssub.s32 %s17, 1
      %s23 = ssub.s32 %s17, 2
      %s30 = sadd.s32 1, %s25
      %p31 = scmp.ge.s32.totalorder %s30, 4
      %s32 = scalar_select %p31, 0, %s30
      %s33 = sadd.s32 1, %s24
      %s34 = scalar_select %p31, %s33, %s24
      %p35 = scmp.ge.s32.totalorder %s34, 2
      %s36 = scalar_select %p35, 0, %s34
      %s37 = ssub.s32 %s24, %s36
      %s38 = ssub.s32 %s25, %s32
      %s39 = sor.u32 %s37, %s38
      %p40 = scmp.eq.s32.totalorder %s39, 0
      %s42 = sadd.s32 %s41, 1
      %s43 = scalar_select %p40, %s41, %s42
      %p46 = pneg %p40
      %p47 = scmp.eq.s32.totalorder %s17, 7
      %p48 = por %p46, %p47
      %p49 = scmp.ne.s32.totalorder %s41, %s44
      %p50 = scmp.eq.s32.totalorder %s17, 0
      %p51 = por %p49, %p50
      %p52 = scmp.ne.s32.totalorder %s41, %s44
      %p53 = scmp.eq.s32.totalorder %s22, 7
      %p54 = por %p52, %p53
      %p55 = scmp.ne.s32.totalorder %s44, %s45
      %p56 = scmp.eq.s32.totalorder %s22, 0
      %p57 = por %p55, %p56
      %p58 = scmp.ne.s32.totalorder %s44, %s45
      %p59 = scmp.eq.s32.totalorder %s23, 7
      %p60 = por %p58, %p59
      %p62 = scmp.ne.s32.totalorder %s45, %s61
      %p63 = scmp.eq.s32.totalorder %s23, 0
      %p64 = por %p62, %p63
      %s66 = sadd.s32 %s65, 1
      %p69 = scmp.eq.s32.totalorder %s17, 7
      %p70 = scmp.ne.s32.totalorder %s65, %s67
      %p71 = scmp.eq.s32.totalorder %s17, 0
      %p72 = por %p70, %p71
      %p73 = scmp.ne.s32.totalorder %s65, %s67
      %p74 = scmp.eq.s32.totalorder %s22, 7
      %p75 = por %p73, %p74
      %p76 = scmp.ne.s32.totalorder %s67, %s68
      %p77 = scmp.eq.s32.totalorder %s22, 0
      %p78 = por %p76, %p77
      %p79 = scmp.ne.s32.totalorder %s67, %s68
      %p80 = scmp.eq.s32.totalorder %s23, 7
      %p81 = por %p79, %p80
      %p83 = scmp.ne.s32.totalorder %s68, %s82
      %p84 = scmp.eq.s32.totalorder %s23, 0
      %p85 = por %p83, %p84
      %s87 = sadd.s32 %s86, 1
      %p90 = scmp.eq.s32.totalorder %s17, 7
      %p91 = scmp.ne.s32.totalorder %s86, %s88
      %p92 = scmp.eq.s32.totalorder %s17, 0
      %p93 = por %p91, %p92
      %p94 = scmp.ne.s32.totalorder %s86, %s88
      %p95 = scmp.eq.s32.totalorder %s22, 7
      %p96 = por %p94, %p95
      %p97 = scmp.ne.s32.totalorder %s88, %s89
      %p98 = scmp.eq.s32.totalorder %s22, 0
      %p99 = por %p97, %p98
      %p100 = scmp.ne.s32.totalorder %s88, %s89
      %p101 = scmp.eq.s32.totalorder %s23, 7
      %p102 = por %p100, %p101
      %p104 = scmp.ne.s32.totalorder %s89, %s103
      %p105 = scmp.eq.s32.totalorder %s23, 0
      %p106 = por %p104, %p105
      %s108 = sadd.s32 %s107, 1
      %p111 = scmp.eq.s32.totalorder %s17, 7
      %p112 = scmp.ne.s32.totalorder %s107, %s109
      %p113 = scmp.eq.s32.totalorder %s17, 0
      %p114 = por %p112, %p113
      %p115 = scmp.ne.s32.totalorder %s107, %s109
      %p116 = scmp.eq.s32.totalorder %s22, 7
      %p117 = por %p115, %p116
      %p118 = scmp.ne.s32.totalorder %s109, %s110
      %p119 = scmp.eq.s32.totalorder %s22, 0
      %p120 = por %p118, %p119
      %p121 = scmp.ne.s32.totalorder %s109, %s110
      %p122 = scmp.eq.s32.totalorder %s23, 7
      %p123 = por %p121, %p122
      %p125 = scmp.ne.s32.totalorder %s110, %s124
      %p126 = scmp.eq.s32.totalorder %s23, 0
      %p127 = por %p125, %p126
      %s128 = ssub.s32 %s24, %s36
      %p129 = scmp.eq.s32.totalorder %s128, 0
      %s131 = sadd.s32 %s130, 1
      %s132 = scalar_select %p129, %s130, %s131
      %p135 = pneg %p129
      %p136 = scmp.eq.s32.totalorder %s17, 7
      %p137 = por %p135, %p136
      %p138 = scmp.ne.s32.totalorder %s130, %s133
      %p139 = scmp.eq.s32.totalorder %s17, 0
      %p140 = por %p138, %p139
      %p141 = scmp.ne.s32.totalorder %s130, %s133
      %p142 = scmp.eq.s32.totalorder %s22, 7
      %p143 = por %p141, %p142
      %p144 = scmp.ne.s32.totalorder %s133, %s134
      %p145 = scmp.eq.s32.totalorder %s22, 0
      %p146 = por %p144, %p145
      %p147 = scmp.ne.s32.totalorder %s133, %s134
      %p148 = scmp.eq.s32.totalorder %s23, 7
      %p149 = por %p147, %p148
      %p151 = scmp.ne.s32.totalorder %s134, %s150
      %p152 = scmp.eq.s32.totalorder %s23, 0
      %p153 = por %p151, %p152
      %s154 = ssub.s32 %s24, %s36
      %s155 = ssub.s32 %s25, %s32
      %s156 = sor.u32 %s154, %s155
      %p157 = scmp.eq.s32.totalorder %s156, 0
      %s159 = sadd.s32 %s158, 1
      %s160 = scalar_select %p157, %s158, %s159
      %p163 = pneg %p157
      %p164 = scmp.eq.s32.totalorder %s17, 7
      %p165 = por %p163, %p164
      %p166 = scmp.ne.s32.totalorder %s158, %s161
      %p167 = scmp.eq.s32.totalorder %s17, 0
      %p168 = por %p166, %p167
      %p169 = scmp.ne.s32.totalorder %s158, %s161
      %p170 = scmp.eq.s32.totalorder %s22, 7
      %p171 = por %p169, %p170
      %p172 = scmp.ne.s32.totalorder %s161, %s162
      %p173 = scmp.eq.s32.totalorder %s22, 0
      %p174 = por %p172, %p173
      %p175 = scmp.ne.s32.totalorder %s161, %s162
      %p176 = scmp.eq.s32.totalorder %s23, 7
      %p177 = por %p175, %p176
      %p179 = scmp.ne.s32.totalorder %s162, %s178
      %p180 = scmp.eq.s32.totalorder %s23, 0
      %p181 = por %p179, %p180
      %p182 = scmp.le.s32.totalorder 1, %s17
      %p183 = scmp.lt.s32.totalorder %s17, 9
      %p184 = pnand %p182, %p183
      %p185 = pneg %p184
      // Predicated region
      $region9: #{tpu_custom_call.1} parent=5 // pred_check
        _
      $region10: #{tpu_custom_call.1} parent=5 // pred_check_branch
        %187 = sbr.rel (%p184) target = $region12
      $region11: #{tpu_custom_call.1} parent=5 // pred_region
        %s188 = ssub.s32 %s17, 1
        // Predicated region
        $region13: #{tpu_custom_call.1} parent=11 // pred_check
          %p189 = pneg %p78
        $region14: #{tpu_custom_call.1} parent=11 // pred_check_branch
          %191 = sbr.rel (%p189) target = $region16
        $region15: #{tpu_custom_call.1} parent=11 // pred_region
          _
        $region16: #{tpu_custom_call.1} parent=11 // pred_fallthru
          _
        // Predicated region
        $region17: #{tpu_custom_call.1} parent=11 // pred_check
          %p192 = pneg %p99
        $region18: #{tpu_custom_call.1} parent=11 // pred_check_branch
          %194 = sbr.rel (%p192) target = $region20
        $region19: #{tpu_custom_call.1} parent=11 // pred_region
          _
        $region20: #{tpu_custom_call.1} parent=11 // pred_fallthru
          _
        // Predicated region
        $region21: #{tpu_custom_call.1} parent=11 // pred_check
          %p195 = pneg %p120
        $region22: #{tpu_custom_call.1} parent=11 // pred_check_branch
          %197 = sbr.rel (%p195) target = $region24
        $region23: #{tpu_custom_call.1} parent=11 // pred_region
          _
        $region24: #{tpu_custom_call.1} parent=11 // pred_fallthru
          _
        // Predicated region
        $region25: #{tpu_custom_call.1} parent=11 // pred_check
          %p198 = pneg %p146
        $region26: #{tpu_custom_call.1} parent=11 // pred_check_branch
          %200 = sbr.rel (%p198) target = $region28
        $region27: #{tpu_custom_call.1} parent=11 // pred_region
          %p201 = scmp.lt.s32.totalorder %s26, 1
          %s202 = scalar_select %p201, %s26, 1
          %s203 = smul.addr %s202, 4
          %s204 = smul.addr %s203, 8
          %s205 = scalar_lea.vmem %s4, %s204
        $region28: #{tpu_custom_call.1} parent=11 // pred_fallthru
          _
      $region12: #{tpu_custom_call.1} parent=5 // pred_fallthru
        _
      %p206 = scmp.lt.s32.totalorder %s17, 8
      // Predicated region
      $region29: #{tpu_custom_call.1} parent=5 // pred_check
        %p207 = pneg %p206
      $region30: #{tpu_custom_call.1} parent=5 // pred_check_branch
        %209 = sbr.rel (%p207) target = $region32
      $region31: #{tpu_custom_call.1} parent=5 // pred_region
        // Predicated region
        $region33: #{tpu_custom_call.1} parent=31 // pred_check
          %p210 = pneg %p51
        $region34: #{tpu_custom_call.1} parent=31 // pred_check_branch
          %212 = sbr.rel (%p210) target = $region36
        $region35: #{tpu_custom_call.1} parent=31 // pred_region
          %s213 = sand.u32 %s41, 1
          %s214 = scalar_lea.sflag [#allocation3], %s213
          %s215 = sand.u32 %s41, 1
          %s216 = smul.addr %s215, 32
          %s217 = scalar_lea.vmem [#allocation2], %s216
          %s219 = ssub.s32 512, 512
          %220 = vsyncadd %s214, %s219
          %s221 = smul.addr %s24, 16
          %s222 = sadd.s32 %s25, %s221
          %s223 = smul.addr %s222, 128
          %s224 = scalar_lea.hbm %s0, %s223
          %s225 = sshll.u32 %s217, 4
          %s226 = int_to_ptr.vmem [resolvable:$true] %s225
          %231 = dma.hbm_to_vmem [thread:$0]  %s224, 512, %s226, %s214, 512, 128, 8
        $region36: #{tpu_custom_call.1} parent=31 // pred_fallthru
          _
      $region32: #{tpu_custom_call.1} parent=5 // pred_fallthru
        _
      %p232 = scmp.le.s32.totalorder 1, %s17
      %p233 = scmp.lt.s32.totalorder %s17, 9
      %p234 = pnand %p232, %p233
      %p235 = pneg %p234
      // Predicated region
      $region37: #{tpu_custom_call.1} parent=5 // pred_check
        _
      $region38: #{tpu_custom_call.1} parent=5 // pred_check_branch
        %237 = sbr.rel (%p234) target = $region40
      $region39: #{tpu_custom_call.1} parent=5 // pred_region
        %s238 = ssub.s32 %s17, 1
        %s239 = sand.u32 %s44, 1
        %s240 = scalar_lea.sflag [#allocation3], %s239
        %s241 = sand.u32 %s44, 1
        %s242 = smul.addr %s241, 32
        %s243 = scalar_lea.vmem [#allocation2], %s242
        // Predicated region
        $region41: #{tpu_custom_call.1} parent=39 // pred_check
          %p244 = pneg %p57
        $region42: #{tpu_custom_call.1} parent=39 // pred_check_branch
          %246 = sbr.rel (%p244) target = $region44
        $region43: #{tpu_custom_call.1} parent=39 // pred_region
          %247 = dma.done %s240, 512
        $region44: #{tpu_custom_call.1} parent=39 // pred_fallthru
          _
        %s248 = sand.u32 %s44, 1
        %s249 = scalar_lea.sflag [#allocation3], %s248
        %s250 = sand.u32 %s44, 1
        %s251 = smul.addr %s250, 32
        %s252 = scalar_lea.vmem [#allocation2], %s251
        %p253 = pneg %p57
        %p254 = pneg %p54
        %p255 = pneg %p78
        %p256 = pneg %p75
        %p257 = pneg %p99
        %p258 = pneg %p96
        %p259 = pneg %p120
        %p260 = pneg %p117
        %p261 = scmp.lt.s32.totalorder %s26, 1
        %s262 = scalar_select %p261, %s26, 1
        %s263 = smul.addr %s262, 4
        %s264 = smul.addr %s263, 8
        %s265 = scalar_lea.vmem %s4, %s264
        %p266 = pneg %p146
        %p267 = pneg %p143
        %p268 = pneg %p174
        %p269 = pneg %p171
        %s270 = sand.u32 %s161, 1
        %s271 = scalar_lea.sflag [#allocation4], %s270
        %s272 = sand.u32 %s161, 1
        %s273 = smul.addr %s272, 32
        %s274 = scalar_lea.vmem [#allocation5], %s273
        %p275 = scmp.lt.s32.totalorder %s26, 1
        %s276 = scalar_select %p275, %s26, 1
        %s277 = smul.addr %s276, 4
        %s278 = smul.addr %s277, 8
        %s279 = scalar_lea.vmem %s4, %s278
        %v280 = vld [vmem:[%s1] sm:$0xff]
        %v281 = vld [vmem:[%s1 + $0x8] sm:$0xff]
        %v282 = vld [vmem:[%s1 + $0x10] sm:$0xff]
        %v283 = vld [vmem:[%s1 + $0x18] sm:$0xff]
        %v284 = vld [vmem:[%s1 + $0x20] sm:$0xff]
        %v285 = vld [vmem:[%s1 + $0x28] sm:$0xff]
        %v286 = vld [vmem:[%s1 + $0x30] sm:$0xff]
        %v287 = vld [vmem:[%s1 + $0x38] sm:$0xff]
        %v288 = vld [vmem:[%s243] sm:$0xff]
        %v289 = vld [vmem:[%s243 + $0x8] sm:$0xff]
        %v290 = vld [vmem:[%s243 + $0x10] sm:$0xff]
        %v291 = vld [vmem:[%s243 + $0x18] sm:$0xff]
        %v292 = vld [vmem:[%s2] sm:$0xff]
        %v293 = vld [vmem:[%s2 + $0x8] sm:$0xff]
        %v294 = vld [vmem:[%s2 + $0x10] sm:$0xff]
        %v295 = vld [vmem:[%s2 + $0x18] sm:$0xff]
        %v296 = vld [vmem:[%s2 + $0x20] sm:$0xff]
        %v297 = vld [vmem:[%s2 + $0x28] sm:$0xff]
        %v298 = vld [vmem:[%s2 + $0x30] sm:$0xff]
        %v299 = vld [vmem:[%s2 + $0x38] sm:$0xff]
        %301 = vset.pattern.permute.xlu0 0
        %302 = vperm.xlu0 %301, %v292
        %v303 = vpop.permute.xlu0 %302
        %306 = vset.pattern.permute.xlu0 0
        %307 = vperm.xlu0 %306, %v293
        %v308 = vpop.permute.xlu0 %307
        %311 = vset.pattern.permute.xlu0 0
        %312 = vperm.xlu0 %311, %v294
        %v313 = vpop.permute.xlu0 %312
        %316 = vset.pattern.permute.xlu0 0
        %317 = vperm.xlu0 %316, %v295
        %v318 = vpop.permute.xlu0 %317
        %321 = vset.pattern.permute.xlu0 0
        %322 = vperm.xlu0 %321, %v296
        %v323 = vpop.permute.xlu0 %322
        %326 = vset.pattern.permute.xlu0 0
        %327 = vperm.xlu0 %326, %v297
        %v328 = vpop.permute.xlu0 %327
        %331 = vset.pattern.permute.xlu0 0
        %332 = vperm.xlu0 %331, %v298
        %v333 = vpop.permute.xlu0 %332
        %336 = vset.pattern.permute.xlu0 0
        %337 = vperm.xlu0 %336, %v299
        %v338 = vpop.permute.xlu0 %337
        %vm340 = vcmask 261120
        %v342 = vsel %vm340, %v280, 0
        %v345 = vsel %vm340, %v281, 0
        %v348 = vsel %vm340, %v282, 0
        %v351 = vsel %vm340, %v283, 0
        %v354 = vsel %vm340, %v284, 0
        %v357 = vsel %vm340, %v285, 0
        %v360 = vsel %vm340, %v286, 0
        %v363 = vsel %vm340, %v287, 0
        %365 = vmatprep.subr.mxu0 0.0
        %366 = vmatpush1.msra.mxu0 %v288
        %367 = vmatprep.subr.mxu0 0.0
        %368 = vmatpush1.msra.mxu0 %v289
        %369 = vmatprep.subr.mxu0 0.0
        %370 = vmatpush1.msra.mxu0 %v290
        %371 = vmatprep.subr.mxu0 0.0
        %372 = vmatpush1.msra.mxu0 %v291
        %373 = vmatprep.subr.mxu0 0.0
        %374 = vmatpush1.msra.mxu0 0.0
        %375 = vmatprep.subr.mxu0 0.0
        %376 = vmatpush1.msra.mxu0 0.0
        %377 = vmatprep.subr.mxu0 0.0
        %378 = vmatpush1.msra.mxu0 0.0
        %379 = vmatprep.subr.mxu0 0.0
        %380 = vmatpush1.msra.mxu0 0.0
        %381 = vmatprep.subr.mxu0 0.0
        %382 = vmatpush1.msra.mxu0 0.0
        %383 = vmatprep.subr.mxu0 0.0
        %384 = vmatpush1.msra.mxu0 0.0
        %385 = vmatprep.subr.mxu0 0.0
        %386 = vmatpush1.msra.mxu0 0.0
        %387 = vmatprep.subr.mxu0 0.0
        %388 = vmatpush1.msra.mxu0 0.0
        %389 = vmatprep.subr.mxu0 0.0
        %390 = vmatpush1.msra.mxu0 0.0
        %391 = vmatprep.subr.mxu0 0.0
        %392 = vmatpush1.msra.mxu0 0.0
        %393 = vmatprep.subr.mxu0 0.0
        %394 = vmatpush1.msra.mxu0 0.0
        %395 = vmatprep.subr.mxu0 0.0
        %396 = vmatpush1.msra.mxu0 0.0
        %397 = vmatprep.subr.mxu0 0.0
        %398 = vmatpush1.msra.mxu0 0.0
        %399 = vmatprep.subr.mxu0 0.0
        %400 = vmatpush1.msra.mxu0 0.0
        %401 = vmatprep.subr.mxu0 0.0
        %402 = vmatpush1.msra.mxu0 0.0
        %403 = vmatprep.subr.mxu0 0.0
        %404 = vmatpush1.msra.mxu0 0.0
        %405 = vmatprep.subr.mxu0 0.0
        %406 = vmatpush1.msra.mxu0 0.0
        %407 = vmatprep.subr.mxu0 0.0
        %408 = vmatpush1.msra.mxu0 0.0
        %409 = vmatprep.subr.mxu0 0.0
        %410 = vmatpush1.msra.mxu0 0.0
        %411 = vmatprep.subr.mxu0 0.0
        %412 = vmatpush1.msra.mxu0 0.0
        %413 = vmatprep.subr.mxu0 0.0
        %414 = vmatpush1.msra.mxu0 0.0
        %415 = vmatprep.subr.mxu0 0.0
        %416 = vmatpush1.msra.mxu0 0.0
        %417 = vmatprep.subr.mxu0 0.0
        %418 = vmatpush1.msra.mxu0 0.0
        %419 = vmatprep.subr.mxu0 0.0
        %420 = vmatpush1.msra.mxu0 0.0
        %421 = vmatprep.subr.mxu0 0.0
        %422 = vmatpush1.msra.mxu0 0.0
        %423 = vmatprep.subr.mxu0 0.0
        %424 = vmatpush1.msra.mxu0 0.0
        %425 = vmatprep.subr.mxu0 0.0
        %426 = vmatpush1.msra.mxu0 0.0
        %427 = vmatprep.subr.mxu0 0.0
        %428 = vmatpush1.msra.mxu0 0.0
        %429 = vmatprep.mubr.f32.mxu0 0.0
        %430 = vmatmul.mubr.f32.gmra.mrb[0].mxu0 %v342
        %v431 = vpop.f32.mrb[0].mxu0
        %v432 = vadd.f32 %v303, %v431
        %v433 = vpop.f32.mrb[0].mxu0
        %434 = vmatprep.mubr.f32.mxu0 0.0
        %435 = vmatmul.mubr.f32.gmra.mrb[0].mxu0 %v345
        %v436 = vpop.f32.mrb[0].mxu0
        %v437 = vadd.f32 %v308, %v436
        %v438 = vpop.f32.mrb[0].mxu0
        %439 = vmatprep.mubr.f32.mxu0 0.0
        %440 = vmatmul.mubr.f32.gmra.mrb[0].mxu0 %v348
        %v441 = vpop.f32.mrb[0].mxu0
        %v442 = vadd.f32 %v313, %v441
        %v443 = vpop.f32.mrb[0].mxu0
        %444 = vmatprep.mubr.f32.mxu0 0.0
        %445 = vmatmul.mubr.f32.gmra.mrb[0].mxu0 %v351
        %v446 = vpop.f32.mrb[0].mxu0
        %v447 = vadd.f32 %v318, %v446
        %v448 = vpop.f32.mrb[0].mxu0
        %449 = vmatprep.mubr.f32.mxu0 0.0
        %450 = vmatmul.mubr.f32.gmra.mrb[0].mxu0 %v354
        %v451 = vpop.f32.mrb[0].mxu0
        %v452 = vadd.f32 %v323, %v451
        %v453 = vpop.f32.mrb[0].mxu0
        %454 = vmatprep.mubr.f32.mxu0 0.0
        %455 = vmatmul.mubr.f32.gmra.mrb[0].mxu0 %v357
        %v456 = vpop.f32.mrb[0].mxu0
        %v457 = vadd.f32 %v328, %v456
        %v458 = vpop.f32.mrb[0].mxu0
        %459 = vmatprep.mubr.f32.mxu0 0.0
        %460 = vmatmul.mubr.f32.gmra.mrb[0].mxu0 %v360
        %v461 = vpop.f32.mrb[0].mxu0
        %v462 = vadd.f32 %v333, %v461
        %v463 = vpop.f32.mrb[0].mxu0
        %464 = vmatprep.mubr.f32.mxu0 0.0
        %465 = vmatmul.mubr.f32.gmra.mrb[0].mxu0 %v363
        %v466 = vpop.f32.mrb[0].mxu0
        %v467 = vadd.f32 %v338, %v466
        %v468 = vpop.f32.mrb[0].mxu0
        %469 = vdwg.mxu0
        %v470 = vmax.f32 %v432, %v452
        %v471 = vmax.f32 %v437, %v457
        %v472 = vmax.f32 %v442, %v462
        %v473 = vmax.f32 %v447, %v467
        %v474 = vmax.f32 %v470, %v471
        %v475 = vmax.f32 %v472, %v473
        %v476 = vmax.f32 %v474, %v475
        %v477 = vrot.slane %v476, 4
        %v478 = vmax.f32 %v476, %v477
        %v479 = vrot.slane %v478, 2
        %v480 = vmax.f32 %v478, %v479
        %v481 = vrot.slane %v480, 1
        %v482 = vmax.f32 %v480, %v481
        %v483 = vsub.f32 %v432, %v482
        %v484 = vsub.f32 %v437, %v482
        %v485 = vsub.f32 %v442, %v482
        %v486 = vsub.f32 %v447, %v482
        %v487 = vsub.f32 %v452, %v482
        %v488 = vsub.f32 %v457, %v482
        %v489 = vsub.f32 %v462, %v482
        %v490 = vsub.f32 %v467, %v482
        %v491 = vmul.f32 %v483, 1.442695
        %v492 = vpow.pop %v491
        %v493 = vmul.f32 %v484, 1.442695
        %v494 = vpow.pop %v493
        %v495 = vmul.f32 %v485, 1.442695
        %v496 = vpow.pop %v495
        %v497 = vmul.f32 %v486, 1.442695
        %v498 = vpow.pop %v497
        %v499 = vmul.f32 %v487, 1.442695
        %v500 = vpow.pop %v499
        %v501 = vmul.f32 %v488, 1.442695
        %v502 = vpow.pop %v501
        %v503 = vmul.f32 %v489, 1.442695
        %v504 = vpow.pop %v503
        %v505 = vmul.f32 %v490, 1.442695
        %v506 = vpow.pop %v505
        %v507 = vadd.f32 %v492, %v494
        %v508 = vadd.f32 %v507, %v496
        %v509 = vadd.f32 %v508, %v498
        %v510 = vadd.f32 %v509, %v500
        %v511 = vadd.f32 %v510, %v502
        %v512 = vadd.f32 %v511, %v504
        %v513 = vadd.f32 %v512, %v506
        %v514 = vrot.slane %v513, 4
        %v515 = vadd.f32 %v513, %v514
        %v516 = vrot.slane %v515, 2
        %v517 = vadd.f32 %v515, %v516
        %v518 = vrot.slane %v517, 1
        %v519 = vadd.f32 %v517, %v518
        %v520 = vld [vmem:[%s3] sm:$0xff]
        %v521 = vld [vmem:[%s3 + $0x8] sm:$0xff]
        %v522 = vld [vmem:[%s3 + $0x10] sm:$0xff]
        %v523 = vld [vmem:[%s3 + $0x18] sm:$0xff]
        %vm524 = vcmask 523264
        %v526 = vsel %vm524, %v520, 0
        %v529 = vsel %vm524, %v521, 0
        %v532 = vsel %vm524, %v522, 0
        %v535 = vsel %vm524, %v523, 0
        %537 = vmatprep.subr.mxu0 0.0
        %538 = vmatpush1.msra.mxu0 %v492
        %539 = vmatprep.subr.mxu0 0.0
        %540 = vmatpush1.msra.mxu0 %v494
        %541 = vmatprep.subr.mxu0 0.0
        %542 = vmatpush1.msra.mxu0 %v496
        %543 = vmatprep.subr.mxu0 0.0
        %544 = vmatpush1.msra.mxu0 %v498
        %545 = vmatprep.subr.mxu0 0.0
        %546 = vmatpush1.msra.mxu0 %v500
        %547 = vmatprep.subr.mxu0 0.0
        %548 = vmatpush1.msra.mxu0 %v502
        %549 = vmatprep.subr.mxu0 0.0
        %550 = vmatpush1.msra.mxu0 %v504
        %551 = vmatprep.subr.mxu0 0.0
        %552 = vmatpush1.msra.mxu0 %v506
        %553 = vmatprep.subr.mxu0 0.0
        %554 = vmatpush1.msra.mxu0 0.0
        %555 = vmatprep.subr.mxu0 0.0
        %556 = vmatpush1.msra.mxu0 0.0
        %557 = vmatprep.subr.mxu0 0.0
        %558 = vmatpush1.msra.mxu0 0.0
        %559 = vmatprep.subr.mxu0 0.0
        %560 = vmatpush1.msra.mxu0 0.0
        %561 = vmatprep.subr.mxu0 0.0
        %562 = vmatpush1.msra.mxu0 0.0
        %563 = vmatprep.subr.mxu0 0.0
        %564 = vmatpush1.msra.mxu0 0.0
        %565 = vmatprep.subr.mxu0 0.0
        %566 = vmatpush1.msra.mxu0 0.0
        %567 = vmatprep.subr.mxu0 0.0
        %568 = vmatpush1.msra.mxu0 0.0
        %569 = vmatprep.subr.mxu0 0.0
        %570 = vmatpush1.msra.mxu0 0.0
        %571 = vmatprep.subr.mxu0 0.0
        %572 = vmatpush1.msra.mxu0 0.0
        %573 = vmatprep.subr.mxu0 0.0
        %574 = vmatpush1.msra.mxu0 0.0
        %575 = vmatprep.subr.mxu0 0.0
        %576 = vmatpush1.msra.mxu0 0.0
        %577 = vmatprep.subr.mxu0 0.0
        %578 = vmatpush1.msra.mxu0 0.0
        %579 = vmatprep.subr.mxu0 0.0
        %580 = vmatpush1.msra.mxu0 0.0
        %581 = vmatprep.subr.mxu0 0.0
        %582 = vmatpush1.msra.mxu0 0.0
        %583 = vmatprep.subr.mxu0 0.0
        %584 = vmatpush1.msra.mxu0 0.0
        %585 = vmatprep.subr.mxu0 0.0
        %586 = vmatpush1.msra.mxu0 0.0
        %587 = vmatprep.subr.mxu0 0.0
        %588 = vmatpush1.msra.mxu0 0.0
        %589 = vmatprep.subr.mxu0 0.0
        %590 = vmatpush1.msra.mxu0 0.0
        %591 = vmatprep.subr.mxu0 0.0
        %592 = vmatpush1.msra.mxu0 0.0
        %593 = vmatprep.subr.mxu0 0.0
        %594 = vmatpush1.msra.mxu0 0.0
        %595 = vmatprep.subr.mxu0 0.0
        %596 = vmatpush1.msra.mxu0 0.0
        %597 = vmatprep.subr.mxu0 0.0
        %598 = vmatpush1.msra.mxu0 0.0
        %599 = vmatprep.subr.mxu0 0.0
        %600 = vmatpush1.msra.mxu0 0.0
        %601 = vmatprep.mubr.f32.mxu0 0.0
        %602 = vmatmul.mubr.f32.gmra.mrb[0].mxu0 %v526
        %v603 = vpop.f32.mrb[0].mxu0
        %v604 = vadd.f32 0.0, %v603
        %v605 = vpop.f32.mrb[0].mxu0
        %606 = vmatprep.mubr.f32.mxu0 0.0
        %607 = vmatmul.mubr.f32.gmra.mrb[0].mxu0 %v529
        %v608 = vpop.f32.mrb[0].mxu0
        %v609 = vadd.f32 0.0, %v608
        %v610 = vpop.f32.mrb[0].mxu0
        %611 = vmatprep.mubr.f32.mxu0 0.0
        %612 = vmatmul.mubr.f32.gmra.mrb[0].mxu0 %v532
        %v613 = vpop.f32.mrb[0].mxu0
        %v614 = vadd.f32 0.0, %v613
        %v615 = vpop.f32.mrb[0].mxu0
        %616 = vmatprep.mubr.f32.mxu0 0.0
        %617 = vmatmul.mubr.f32.gmra.mrb[0].mxu0 %v535
        %v618 = vpop.f32.mrb[0].mxu0
        %v619 = vadd.f32 0.0, %v618
        %v620 = vpop.f32.mrb[0].mxu0
        %621 = vdwg.mxu0
        %v622 = vrcp.pop %v519
        %v623 = vmul.f32 %v604, %v622
        %v624 = vmul.f32 %v609, %v622
        %v625 = vmul.f32 %v614, %v622
        %v626 = vmul.f32 %v619, %v622
        %v627 = vld [vmem:[%s279] sm:$0xff]
        %v628 = vld [vmem:[%s279 + $0x8] sm:$0xff]
        %v629 = vld [vmem:[%s279 + $0x10] sm:$0xff]
        %v630 = vld [vmem:[%s279 + $0x18] sm:$0xff]
        %632 = vset.pattern.permute.xlu0 0
        %633 = vperm.xlu0 %632, %v627
        %v634 = vpop.permute.xlu0 %633
        %637 = vset.pattern.permute.xlu0 0
        %638 = vperm.xlu0 %637, %v628
        %v639 = vpop.permute.xlu0 %638
        %642 = vset.pattern.permute.xlu0 0
        %643 = vperm.xlu0 %642, %v629
        %v644 = vpop.permute.xlu0 %643
        %647 = vset.pattern.permute.xlu0 0
        %648 = vperm.xlu0 %647, %v630
        %v649 = vpop.permute.xlu0 %648
        %v651 = vadd.f32 %v623, %v634
        %v652 = vadd.f32 %v624, %v639
        %v653 = vadd.f32 %v625, %v644
        %v654 = vadd.f32 %v626, %v649
        %655 = vst [vmem:[%s274] sm:$0xff] %v651
        %656 = vst [vmem:[%s274 + $0x8] sm:$0xff] %v652
        %657 = vst [vmem:[%s274 + $0x10] sm:$0xff] %v653
        %658 = vst [vmem:[%s274 + $0x18] sm:$0xff] %v654
        %s659 = sand.u32 %s161, 1
        %s660 = scalar_lea.sflag [#allocation4], %s659
        %s661 = sand.u32 %s161, 1
        %s662 = smul.addr %s661, 32
        %s663 = scalar_lea.vmem [#allocation5], %s662
        // Predicated region
        $region45: #{tpu_custom_call.1} parent=39 // pred_check
          %p664 = pneg %p171
        $region46: #{tpu_custom_call.1} parent=39 // pred_check_branch
          %666 = sbr.rel (%p664) target = $region48
        $region47: #{tpu_custom_call.1} parent=39 // pred_region
          %s668 = ssub.s32 512, 512
          %669 = vsyncadd %s660, %s668
          %s670 = smul.addr %s26, 16
          %s671 = sadd.s32 %s27, %s670
          %s672 = smul.addr %s671, 128
          %s673 = scalar_lea.hbm %s5, %s672
          %s674 = sshll.u32 %s663, 4
          %s675 = int_to_ptr.vmem [resolvable:$true] %s674
          %680 = dma.vmem_to_hbm [thread:$0]  %s675, 512, %s673, %s660, 128, 512, 8
        $region48: #{tpu_custom_call.1} parent=39 // pred_fallthru
          _
      $region40: #{tpu_custom_call.1} parent=5 // pred_fallthru
        _
      %p681 = scmp.le.s32.totalorder 2, %s17
      // Predicated region
      $region49: #{tpu_custom_call.1} parent=5 // pred_check
        %p682 = pneg %p681
      $region50: #{tpu_custom_call.1} parent=5 // pred_check_branch
        %684 = sbr.rel (%p682) target = $region52
      $region51: #{tpu_custom_call.1} parent=5 // pred_region
        %s685 = ssub.s32 %s17, 2
        // Predicated region
        $region53: #{tpu_custom_call.1} parent=51 // pred_check
          %p686 = pneg %p177
        $region54: #{tpu_custom_call.1} parent=51 // pred_check_branch
          %688 = sbr.rel (%p686) target = $region56
        $region55: #{tpu_custom_call.1} parent=51 // pred_region
          %s689 = sand.u32 %s162, 1
          %s690 = scalar_lea.sflag [#allocation4], %s689
          %s691 = sand.u32 %s162, 1
          %s692 = smul.addr %s691, 32
          %s693 = scalar_lea.vmem [#allocation5], %s692
          %694 = dma.done %s690, 512
        $region56: #{tpu_custom_call.1} parent=51 // pred_fallthru
          _
      $region52: #{tpu_custom_call.1} parent=5 // pred_fallthru
        _
    $region6: #{tpu_custom_call.1} parent=1 // loop_footer
      %s21 = sadd.s32 1, %s17
    $region7: #{tpu_custom_call.1} parent=1 // loop_footer_branch
      %16 = sbr.rel target = $region3
    $region8: #{tpu_custom_call.1} parent=1 // loop_exit
      _
    %695 = vsyncpa [#allocation3], 1
    %s696 = scalar_lea.sflag [#allocation3], 1
    %697 = vsyncpa %s696, 1
    %698 = vsyncpa [#allocation4], 1
    %s699 = scalar_lea.sflag [#allocation4], 1
    %700 = vsyncpa %s699, 1

// kernel: tpu_custom_call.1
$region0: #{tpu_custom_call.1}
  #allocation0 [shape = 'u32[]', space=smem, size = 0x4, offset = 0x4, fixed_abs, tag = 'smem constant byte address 0x4 - core index']
  #allocation1 [shape = 'u32[144,128]{1,0:T(1,128)}', space=vmem, size = 0x12000, scoped, tag = 'internal scratch']
  %s0 = inlined_call_operand.hbm [shape: f32[2,32,512], index: 0, kind: input, shape index: {}]
  %s1 = inlined_call_operand.vmem [shape: f32[64,32], index: 1, kind: input, shape index: {}]
  %s2 = inlined_call_operand.vmem [shape: f32[64,1], index: 2, kind: input, shape index: {}]
  %s3 = inlined_call_operand.vmem [shape: f32[32,64], index: 3, kind: input, shape index: {}]
  %s4 = inlined_call_operand.vmem [shape: f32[2,32,1], index: 4, kind: input, shape index: {}]
  %s5 = inlined_call_operand.hbm [shape: f32[2,32,512], index: 5, kind: output, shape index: {}]
  %s6 = sld [smem:[#allocation0]]
  $region57: #{tpu_custom_call.1} parent=0
    _
  %s8 = ssub.s32 1, %s6
  %s9 = scalar_select 0, %s8, %s6
  $region1: #{tpu_custom_call.1} parent=0
    #allocation2 [shape = 'u8[32768]{0}', space=vmem, size = 0x8000, scoped, tag = 'input window, operand 0']
    #allocation3 [shape = 's32[2]{0}', space=sflag, size = 0x8, scoped, tag = 'scoped memory for tpu_custom_call.1']
    #allocation4 [shape = 's32[2]{0}', space=sflag, size = 0x8, scoped, tag = 'scoped memory for tpu_custom_call.1']
    #allocation5 [shape = 'u8[32768]{0}', space=vmem, size = 0x8000, scoped, tag = 'output window, operand 0']
    %10 = vsyncpa [#allocation3], 0
    %s11 = scalar_lea.sflag [#allocation3], 1
    %12 = vsyncpa %s11, 0
    %13 = vsyncpa [#allocation4], 0
    %s14 = scalar_lea.sflag [#allocation4], 1
    %15 = vsyncpa %s14, 0
    loop: start=0, step=1, limit=10
    $region2: #{tpu_custom_call.1} parent=1 // loop_pre_header
      _
    $region3: #{tpu_custom_call.1} parent=1 // loop_header
      %s17 = sphi 0, %s21
      %p18 = scmp.ge.s32.totalorder %s17, 10
      %s24 = sphi 0, %s36
      %s25 = sphi 0, %s32
      %s26 = sphi 0, %s24
      %s27 = sphi 0, %s25
      %s28 = sphi 0, %s26
      %s29 = sphi 0, %s27
      %s41 = sphi 0, %s43
      %s44 = sphi 0, %s41
      %s45 = sphi 0, %s44
      %s61 = sphi 0, %s45
      %s65 = sphi 0, %s65
      %s67 = sphi 0, %s65
      %s68 = sphi 0, %s67
      %s82 = sphi 0, %s68
      %s86 = sphi 0, %s86
      %s88 = sphi 0, %s86
      %s89 = sphi 0, %s88
      %s103 = sphi 0, %s89
      %s107 = sphi 0, %s107
      %s109 = sphi 0, %s107
      %s110 = sphi 0, %s109
      %s124 = sphi 0, %s110
      %s130 = sphi 0, %s132
      %s133 = sphi 0, %s130
      %s134 = sphi 0, %s133
      %s150 = sphi 0, %s134
      %s158 = sphi 0, %s160
      %s161 = sphi 0, %s158
      %s162 = sphi 0, %s161
      %s178 = sphi 0, %s162
    $region4: #{tpu_custom_call.1} parent=1 // loop_header_branch
      %20 = sbr.rel (%p18) target = $region8
    $region5: #{tpu_custom_call.1} parent=1 // loop_body
      %s22 = ssub.s32 %s17, 1
      %s23 = ssub.s32 %s17, 2
      %s30 = sadd.s32 1, %s25
      %p31 = scmp.ge.s32.totalorder %s30, 4
      %s32 = scalar_select %p31, 0, %s30
      %s33 = sadd.s32 1, %s24
      %s34 = scalar_select %p31, %s33, %s24
      %p35 = scmp.ge.s32.totalorder %s34, 2
      %s36 = scalar_select %p35, 0, %s34
      %s37 = ssub.s32 %s24, %s36
      %s38 = ssub.s32 %s25, %s32
      %s39 = sor.u32 %s37, %s38
      %p40 = scmp.eq.s32.totalorder %s39, 0
      %s42 = sadd.s32 %s41, 1
      %s43 = scalar_select %p40, %s41, %s42
      %p46 = pneg %p40
      %p47 = scmp.eq.s32.totalorder %s17, 7
      %p48 = por %p46, %p47
      %p49 = scmp.ne.s32.totalorder %s41, %s44
      %p50 = scmp.eq.s32.totalorder %s17, 0
      %p51 = por %p49, %p50
      %p52 = scmp.ne.s32.totalorder %s41, %s44
      %p53 = scmp.eq.s32.totalorder %s22, 7
      %p54 = por %p52, %p53
      %p55 = scmp.ne.s32.totalorder %s44, %s45
      %p56 = scmp.eq.s32.totalorder %s22, 0
      %p57 = por %p55, %p56
      %p58 = scmp.ne.s32.totalorder %s44, %s45
      %p59 = scmp.eq.s32.totalorder %s23, 7
      %p60 = por %p58, %p59
      %p62 = scmp.ne.s32.totalorder %s45, %s61
      %p63 = scmp.eq.s32.totalorder %s23, 0
      %p64 = por %p62, %p63
      %s66 = sadd.s32 %s65, 1
      %p69 = scmp.eq.s32.totalorder %s17, 7
      %p70 = scmp.ne.s32.totalorder %s65, %s67
      %p71 = scmp.eq.s32.totalorder %s17, 0
      %p72 = por %p70, %p71
      %p73 = scmp.ne.s32.totalorder %s65, %s67
      %p74 = scmp.eq.s32.totalorder %s22, 7
      %p75 = por %p73, %p74
      %p76 = scmp.ne.s32.totalorder %s67, %s68
      %p77 = scmp.eq.s32.totalorder %s22, 0
      %p78 = por %p76, %p77
      %p79 = scmp.ne.s32.totalorder %s67, %s68
      %p80 = scmp.eq.s32.totalorder %s23, 7
      %p81 = por %p79, %p80
      %p83 = scmp.ne.s32.totalorder %s68, %s82
      %p84 = scmp.eq.s32.totalorder %s23, 0
      %p85 = por %p83, %p84
      %s87 = sadd.s32 %s86, 1
      %p90 = scmp.eq.s32.totalorder %s17, 7
      %p91 = scmp.ne.s32.totalorder %s86, %s88
      %p92 = scmp.eq.s32.totalorder %s17, 0
      %p93 = por %p91, %p92
      %p94 = scmp.ne.s32.totalorder %s86, %s88
      %p95 = scmp.eq.s32.totalorder %s22, 7
      %p96 = por %p94, %p95
      %p97 = scmp.ne.s32.totalorder %s88, %s89
      %p98 = scmp.eq.s32.totalorder %s22, 0
      %p99 = por %p97, %p98
      %p100 = scmp.ne.s32.totalorder %s88, %s89
      %p101 = scmp.eq.s32.totalorder %s23, 7
      %p102 = por %p100, %p101
      %p104 = scmp.ne.s32.totalorder %s89, %s103
      %p105 = scmp.eq.s32.totalorder %s23, 0
      %p106 = por %p104, %p105
      %s108 = sadd.s32 %s107, 1
      %p111 = scmp.eq.s32.totalorder %s17, 7
      %p112 = scmp.ne.s32.totalorder %s107, %s109
      %p113 = scmp.eq.s32.totalorder %s17, 0
      %p114 = por %p112, %p113
      %p115 = scmp.ne.s32.totalorder %s107, %s109
      %p116 = scmp.eq.s32.totalorder %s22, 7
      %p117 = por %p115, %p116
      %p118 = scmp.ne.s32.totalorder %s109, %s110
      %p119 = scmp.eq.s32.totalorder %s22, 0
      %p120 = por %p118, %p119
      %p121 = scmp.ne.s32.totalorder %s109, %s110
      %p122 = scmp.eq.s32.totalorder %s23, 7
      %p123 = por %p121, %p122
      %p125 = scmp.ne.s32.totalorder %s110, %s124
      %p126 = scmp.eq.s32.totalorder %s23, 0
      %p127 = por %p125, %p126
      %s128 = ssub.s32 %s24, %s36
      %p129 = scmp.eq.s32.totalorder %s128, 0
      %s131 = sadd.s32 %s130, 1
      %s132 = scalar_select %p129, %s130, %s131
      %p135 = pneg %p129
      %p136 = scmp.eq.s32.totalorder %s17, 7
      %p137 = por %p135, %p136
      %p138 = scmp.ne.s32.totalorder %s130, %s133
      %p139 = scmp.eq.s32.totalorder %s17, 0
      %p140 = por %p138, %p139
      %p141 = scmp.ne.s32.totalorder %s130, %s133
      %p142 = scmp.eq.s32.totalorder %s22, 7
      %p143 = por %p141, %p142
      %p144 = scmp.ne.s32.totalorder %s133, %s134
      %p145 = scmp.eq.s32.totalorder %s22, 0
      %p146 = por %p144, %p145
      %p147 = scmp.ne.s32.totalorder %s133, %s134
      %p148 = scmp.eq.s32.totalorder %s23, 7
      %p149 = por %p147, %p148
      %p151 = scmp.ne.s32.totalorder %s134, %s150
      %p152 = scmp.eq.s32.totalorder %s23, 0
      %p153 = por %p151, %p152
      %s154 = ssub.s32 %s24, %s36
      %s155 = ssub.s32 %s25, %s32
      %s156 = sor.u32 %s154, %s155
      %p157 = scmp.eq.s32.totalorder %s156, 0
      %s159 = sadd.s32 %s158, 1
      %s160 = scalar_select %p157, %s158, %s159
      %p163 = pneg %p157
      %p164 = scmp.eq.s32.totalorder %s17, 7
      %p165 = por %p163, %p164
      %p166 = scmp.ne.s32.totalorder %s158, %s161
      %p167 = scmp.eq.s32.totalorder %s17, 0
      %p168 = por %p166, %p167
      %p169 = scmp.ne.s32.totalorder %s158, %s161
      %p170 = scmp.eq.s32.totalorder %s22, 7
      %p171 = por %p169, %p170
      %p172 = scmp.ne.s32.totalorder %s161, %s162
      %p173 = scmp.eq.s32.totalorder %s22, 0
      %p174 = por %p172, %p173
      %p175 = scmp.ne.s32.totalorder %s161, %s162
      %p176 = scmp.eq.s32.totalorder %s23, 7
      %p177 = por %p175, %p176
      %p179 = scmp.ne.s32.totalorder %s162, %s178
      %p180 = scmp.eq.s32.totalorder %s23, 0
      %p181 = por %p179, %p180
      %p182 = scmp.le.s32.totalorder 1, %s17
      %p183 = scmp.lt.s32.totalorder %s17, 9
      %p184 = pnand %p182, %p183
      %p185 = pneg %p184
      // Predicated region
      $region9: #{tpu_custom_call.1} parent=5 // pred_check
        _
      $region10: #{tpu_custom_call.1} parent=5 // pred_check_branch
        %187 = sbr.rel (%p184) target = $region12
      $region11: #{tpu_custom_call.1} parent=5 // pred_region
        %s188 = ssub.s32 %s17, 1
        // Predicated region
        $region13: #{tpu_custom_call.1} parent=11 // pred_check
          %p189 = pneg %p78
        $region14: #{tpu_custom_call.1} parent=11 // pred_check_branch
          %191 = sbr.rel (%p189) target = $region16
        $region15: #{tpu_custom_call.1} parent=11 // pred_region
          _
        $region16: #{tpu_custom_call.1} parent=11 // pred_fallthru
          _
        // Predicated region
        $region17: #{tpu_custom_call.1} parent=11 // pred_check
          %p192 = pneg %p99
        $region18: #{tpu_custom_call.1} parent=11 // pred_check_branch
          %194 = sbr.rel (%p192) target = $region20
        $region19: #{tpu_custom_call.1} parent=11 // pred_region
          _
        $region20: #{tpu_custom_call.1} parent=11 // pred_fallthru
          _
        // Predicated region
        $region21: #{tpu_custom_call.1} parent=11 // pred_check
          %p195 = pneg %p120
        $region22: #{tpu_custom_call.1} parent=11 // pred_check_branch
          %197 = sbr.rel (%p195) target = $region24
        $region23: #{tpu_custom_call.1} parent=11 // pred_region
          _
        $region24: #{tpu_custom_call.1} parent=11 // pred_fallthru
          _
      $region12: #{tpu_custom_call.1} parent=5 // pred_fallthru
        _
      %p198 = scmp.lt.s32.totalorder %s17, 8
      // Predicated region
      $region25: #{tpu_custom_call.1} parent=5 // pred_check
        %p199 = pneg %p198
      $region26: #{tpu_custom_call.1} parent=5 // pred_check_branch
        %201 = sbr.rel (%p199) target = $region28
      $region27: #{tpu_custom_call.1} parent=5 // pred_region
        // Predicated region
        $region29: #{tpu_custom_call.1} parent=27 // pred_check
          %p202 = pneg %p51
        $region30: #{tpu_custom_call.1} parent=27 // pred_check_branch
          %204 = sbr.rel (%p202) target = $region32
        $region31: #{tpu_custom_call.1} parent=27 // pred_region
          %s205 = sand.u32 %s41, 1
          %s206 = scalar_lea.sflag [#allocation3], %s205
          %s207 = sand.u32 %s41, 1
          %s208 = smul.addr %s207, 32
          %s209 = scalar_lea.vmem [#allocation2], %s208
          %s211 = ssub.s32 512, 512
          %212 = vsyncadd %s206, %s211
          %s213 = smul.addr %s24, 16
          %s214 = sadd.s32 %s25, %s213
          %s215 = smul.addr %s214, 128
          %s216 = scalar_lea.hbm %s0, %s215
          %s217 = sshll.u32 %s209, 4
          %s218 = int_to_ptr.vmem [resolvable:$true] %s217
          %223 = dma.hbm_to_vmem [thread:$0]  %s216, 512, %s218, %s206, 512, 128, 8
        $region32: #{tpu_custom_call.1} parent=27 // pred_fallthru
          _
        // Predicated region
        $region33: #{tpu_custom_call.1} parent=27 // pred_check
          %p224 = pneg %p140
        $region34: #{tpu_custom_call.1} parent=27 // pred_check_branch
          %226 = sbr.rel (%p224) target = $region36
        $region35: #{tpu_custom_call.1} parent=27 // pred_region
          %p227 = scmp.lt.s32.totalorder %s24, 1
          %s228 = scalar_select %p227, %s24, 1
          %s229 = smul.addr %s228, 4
          %s230 = smul.addr %s229, 8
          %s231 = scalar_lea.vmem %s4, %s230
        $region36: #{tpu_custom_call.1} parent=27 // pred_fallthru
          _
      $region28: #{tpu_custom_call.1} parent=5 // pred_fallthru
        _
      %p232 = scmp.le.s32.totalorder 1, %s17
      %p233 = scmp.lt.s32.totalorder %s17, 9
      %p234 = pnand %p232, %p233
      %p235 = pneg %p234
      // Predicated region
      $region37: #{tpu_custom_call.1} parent=5 // pred_check
        _
      $region38: #{tpu_custom_call.1} parent=5 // pred_check_branch
        %237 = sbr.rel (%p234) target = $region40
      $region39: #{tpu_custom_call.1} parent=5 // pred_region
        %s238 = ssub.s32 %s17, 1
        %s239 = sand.u32 %s44, 1
        %s240 = scalar_lea.sflag [#allocation3], %s239
        %s241 = sand.u32 %s44, 1
        %s242 = smul.addr %s241, 32
        %s243 = scalar_lea.vmem [#allocation2], %s242
        // Predicated region
        $region41: #{tpu_custom_call.1} parent=39 // pred_check
          %p244 = pneg %p57
        $region42: #{tpu_custom_call.1} parent=39 // pred_check_branch
          %246 = sbr.rel (%p244) target = $region44
        $region43: #{tpu_custom_call.1} parent=39 // pred_region
          %247 = dma.done %s240, 512
        $region44: #{tpu_custom_call.1} parent=39 // pred_fallthru
          _
        %s248 = sand.u32 %s44, 1
        %s249 = scalar_lea.sflag [#allocation3], %s248
        %s250 = sand.u32 %s44, 1
        %s251 = smul.addr %s250, 32
        %s252 = scalar_lea.vmem [#allocation2], %s251
        %p253 = pneg %p57
        %p254 = pneg %p54
        %p255 = pneg %p78
        %p256 = pneg %p75
        %p257 = pneg %p99
        %p258 = pneg %p96
        %p259 = pneg %p120
        %p260 = pneg %p117
        %p261 = scmp.lt.s32.totalorder %s26, 1
        %s262 = scalar_select %p261, %s26, 1
        %s263 = smul.addr %s262, 4
        %s264 = smul.addr %s263, 8
        %s265 = scalar_lea.vmem %s4, %s264
        %p266 = pneg %p146
        %p267 = pneg %p143
        %p268 = pneg %p174
        %p269 = pneg %p171
        %s270 = sand.u32 %s161, 1
        %s271 = scalar_lea.sflag [#allocation4], %s270
        %s272 = sand.u32 %s161, 1
        %s273 = smul.addr %s272, 32
        %s274 = scalar_lea.vmem [#allocation5], %s273
        %p275 = scmp.lt.s32.totalorder %s26, 1
        %s276 = scalar_select %p275, %s26, 1
        %s277 = smul.addr %s276, 4
        %s278 = smul.addr %s277, 8
        %s279 = scalar_lea.vmem %s4, %s278
        %v280 = vld [vmem:[%s1] sm:$0xff]
        %v281 = vld [vmem:[%s1 + $0x8] sm:$0xff]
        %v282 = vld [vmem:[%s1 + $0x10] sm:$0xff]
        %v283 = vld [vmem:[%s1 + $0x18] sm:$0xff]
        %v284 = vld [vmem:[%s1 + $0x20] sm:$0xff]
        %v285 = vld [vmem:[%s1 + $0x28] sm:$0xff]
        %v286 = vld [vmem:[%s1 + $0x30] sm:$0xff]
        %v287 = vld [vmem:[%s1 + $0x38] sm:$0xff]
        %v288 = vld [vmem:[%s243] sm:$0xff]
        %v289 = vld [vmem:[%s243 + $0x8] sm:$0xff]
        %v290 = vld [vmem:[%s243 + $0x10] sm:$0xff]
        %v291 = vld [vmem:[%s243 + $0x18] sm:$0xff]
        %v292 = vld [vmem:[%s2] sm:$0xff]
        %v293 = vld [vmem:[%s2 + $0x8] sm:$0xff]
        %v294 = vld [vmem:[%s2 + $0x10] sm:$0xff]
        %v295 = vld [vmem:[%s2 + $0x18] sm:$0xff]
        %v296 = vld [vmem:[%s2 + $0x20] sm:$0xff]
        %v297 = vld [vmem:[%s2 + $0x28] sm:$0xff]
        %v298 = vld [vmem:[%s2 + $0x30] sm:$0xff]
        %v299 = vld [vmem:[%s2 + $0x38] sm:$0xff]
        %301 = vset.pattern.permute.xlu0 0
        %302 = vperm.xlu0 %301, %v292
        %v303 = vpop.permute.xlu0 %302
        %306 = vset.pattern.permute.xlu0 0
        %307 = vperm.xlu0 %306, %v293
        %v308 = vpop.permute.xlu0 %307
        %311 = vset.pattern.permute.xlu0 0
        %312 = vperm.xlu0 %311, %v294
        %v313 = vpop.permute.xlu0 %312
        %316 = vset.pattern.permute.xlu0 0
        %317 = vperm.xlu0 %316, %v295
        %v318 = vpop.permute.xlu0 %317
        %321 = vset.pattern.permute.xlu0 0
        %322 = vperm.xlu0 %321, %v296
        %v323 = vpop.permute.xlu0 %322
        %326 = vset.pattern.permute.xlu0 0
        %327 = vperm.xlu0 %326, %v297
        %v328 = vpop.permute.xlu0 %327
        %331 = vset.pattern.permute.xlu0 0
        %332 = vperm.xlu0 %331, %v298
        %v333 = vpop.permute.xlu0 %332
        %336 = vset.pattern.permute.xlu0 0
        %337 = vperm.xlu0 %336, %v299
        %v338 = vpop.permute.xlu0 %337
        %vm340 = vcmask 261120
        %v342 = vsel %vm340, %v280, 0
        %v345 = vsel %vm340, %v281, 0
        %v348 = vsel %vm340, %v282, 0
        %v351 = vsel %vm340, %v283, 0
        %v354 = vsel %vm340, %v284, 0
        %v357 = vsel %vm340, %v285, 0
        %v360 = vsel %vm340, %v286, 0
        %v363 = vsel %vm340, %v287, 0
        %365 = vmatprep.subr.mxu0 0.0
        %366 = vmatpush1.msra.mxu0 %v288
        %367 = vmatprep.subr.mxu0 0.0
        %368 = vmatpush1.msra.mxu0 %v289
        %369 = vmatprep.subr.mxu0 0.0
        %370 = vmatpush1.msra.mxu0 %v290
        %371 = vmatprep.subr.mxu0 0.0
        %372 = vmatpush1.msra.mxu0 %v291
        %373 = vmatprep.subr.mxu0 0.0
        %374 = vmatpush1.msra.mxu0 0.0
        %375 = vmatprep.subr.mxu0 0.0
        %376 = vmatpush1.msra.mxu0 0.0
        %377 = vmatprep.subr.mxu0 0.0
        %378 = vmatpush1.msra.mxu0 0.0
        %379 = vmatprep.subr.mxu0 0.0
        %380 = vmatpush1.msra.mxu0 0.0
        %381 = vmatprep.subr.mxu0 0.0
        %382 = vmatpush1.msra.mxu0 0.0
        %383 = vmatprep.subr.mxu0 0.0
        %384 = vmatpush1.msra.mxu0 0.0
        %385 = vmatprep.subr.mxu0 0.0
        %386 = vmatpush1.msra.mxu0 0.0
        %387 = vmatprep.subr.mxu0 0.0
        %388 = vmatpush1.msra.mxu0 0.0
        %389 = vmatprep.subr.mxu0 0.0
        %390 = vmatpush1.msra.mxu0 0.0
        %391 = vmatprep.subr.mxu0 0.0
        %392 = vmatpush1.msra.mxu0 0.0
        %393 = vmatprep.subr.mxu0 0.0
        %394 = vmatpush1.msra.mxu0 0.0
        %395 = vmatprep.subr.mxu0 0.0
        %396 = vmatpush1.msra.mxu0 0.0
        %397 = vmatprep.subr.mxu0 0.0
        %398 = vmatpush1.msra.mxu0 0.0
        %399 = vmatprep.subr.mxu0 0.0
        %400 = vmatpush1.msra.mxu0 0.0
        %401 = vmatprep.subr.mxu0 0.0
        %402 = vmatpush1.msra.mxu0 0.0
        %403 = vmatprep.subr.mxu0 0.0
        %404 = vmatpush1.msra.mxu0 0.0
        %405 = vmatprep.subr.mxu0 0.0
        %406 = vmatpush1.msra.mxu0 0.0
        %407 = vmatprep.subr.mxu0 0.0
        %408 = vmatpush1.msra.mxu0 0.0
        %409 = vmatprep.subr.mxu0 0.0
        %410 = vmatpush1.msra.mxu0 0.0
        %411 = vmatprep.subr.mxu0 0.0
        %412 = vmatpush1.msra.mxu0 0.0
        %413 = vmatprep.subr.mxu0 0.0
        %414 = vmatpush1.msra.mxu0 0.0
        %415 = vmatprep.subr.mxu0 0.0
        %416 = vmatpush1.msra.mxu0 0.0
        %417 = vmatprep.subr.mxu0 0.0
        %418 = vmatpush1.msra.mxu0 0.0
        %419 = vmatprep.subr.mxu0 0.0
        %420 = vmatpush1.msra.mxu0 0.0
        %421 = vmatprep.subr.mxu0 0.0
        %422 = vmatpush1.msra.mxu0 0.0
        %423 = vmatprep.subr.mxu0 0.0
        %424 = vmatpush1.msra.mxu0 0.0
        %425 = vmatprep.subr.mxu0 0.0
        %426 = vmatpush1.msra.mxu0 0.0
        %427 = vmatprep.subr.mxu0 0.0
        %428 = vmatpush1.msra.mxu0 0.0
        %429 = vmatprep.mubr.f32.mxu0 0.0
        %430 = vmatmul.mubr.f32.gmra.mrb[0].mxu0 %v342
        %v431 = vpop.f32.mrb[0].mxu0
        %v432 = vadd.f32 %v303, %v431
        %v433 = vpop.f32.mrb[0].mxu0
        %434 = vmatprep.mubr.f32.mxu0 0.0
        %435 = vmatmul.mubr.f32.gmra.mrb[0].mxu0 %v345
        %v436 = vpop.f32.mrb[0].mxu0
        %v437 = vadd.f32 %v308, %v436
        %v438 = vpop.f32.mrb[0].mxu0
        %439 = vmatprep.mubr.f32.mxu0 0.0
        %440 = vmatmul.mubr.f32.gmra.mrb[0].mxu0 %v348
        %v441 = vpop.f32.mrb[0].mxu0
        %v442 = vadd.f32 %v313, %v441
        %v443 = vpop.f32.mrb[0].mxu0
        %444 = vmatprep.mubr.f32.mxu0 0.0
        %445 = vmatmul.mubr.f32.gmra.mrb[0].mxu0 %v351
        %v446 = vpop.f32.mrb[0].mxu0
        %v447 = vadd.f32 %v318, %v446
        %v448 = vpop.f32.mrb[0].mxu0
        %449 = vmatprep.mubr.f32.mxu0 0.0
        %450 = vmatmul.mubr.f32.gmra.mrb[0].mxu0 %v354
        %v451 = vpop.f32.mrb[0].mxu0
        %v452 = vadd.f32 %v323, %v451
        %v453 = vpop.f32.mrb[0].mxu0
        %454 = vmatprep.mubr.f32.mxu0 0.0
        %455 = vmatmul.mubr.f32.gmra.mrb[0].mxu0 %v357
        %v456 = vpop.f32.mrb[0].mxu0
        %v457 = vadd.f32 %v328, %v456
        %v458 = vpop.f32.mrb[0].mxu0
        %459 = vmatprep.mubr.f32.mxu0 0.0
        %460 = vmatmul.mubr.f32.gmra.mrb[0].mxu0 %v360
        %v461 = vpop.f32.mrb[0].mxu0
        %v462 = vadd.f32 %v333, %v461
        %v463 = vpop.f32.mrb[0].mxu0
        %464 = vmatprep.mubr.f32.mxu0 0.0
        %465 = vmatmul.mubr.f32.gmra.mrb[0].mxu0 %v363
        %v466 = vpop.f32.mrb[0].mxu0
        %v467 = vadd.f32 %v338, %v466
        %v468 = vpop.f32.mrb[0].mxu0
        %469 = vdwg.mxu0
        %v470 = vmax.f32 %v432, %v452
        %v471 = vmax.f32 %v437, %v457
        %v472 = vmax.f32 %v442, %v462
        %v473 = vmax.f32 %v447, %v467
        %v474 = vmax.f32 %v470, %v471
        %v475 = vmax.f32 %v472, %v473
        %v476 = vmax.f32 %v474, %v475
        %v477 = vrot.slane %v476, 4
        %v478 = vmax.f32 %v476, %v477
        %v479 = vrot.slane %v478, 2
        %v480 = vmax.f32 %v478, %v479
        %v481 = vrot.slane %v480, 1
        %v482 = vmax.f32 %v480, %v481
        %v483 = vsub.f32 %v432, %v482
        %v484 = vsub.f32 %v437, %v482
        %v485 = vsub.f32 %v442, %v482
        %v486 = vsub.f32 %v447, %v482
        %v487 = vsub.f32 %v452, %v482
        %v488 = vsub.f32 %v457, %v482
        %v489 = vsub.f32 %v462, %v482
        %v490 = vsub.f32 %v467, %v482
        %v491 = vmul.f32 %v483, 1.442695
        %v492 = vpow.pop %v491
        %v493 = vmul.f32 %v484, 1.442695
        %v494 = vpow.pop %v493
        %v495 = vmul.f32 %v485, 1.442695
        %v496 = vpow.pop %v495
        %v497 = vmul.f32 %v486, 1.442695
        %v498 = vpow.pop %v497
        %v499 = vmul.f32 %v487, 1.442695
        %v500 = vpow.pop %v499
        %v501 = vmul.f32 %v488, 1.442695
        %v502 = vpow.pop %v501
        %v503 = vmul.f32 %v489, 1.442695
        %v504 = vpow.pop %v503
        %v505 = vmul.f32 %v490, 1.442695
        %v506 = vpow.pop %v505
        %v507 = vadd.f32 %v492, %v494
        %v508 = vadd.f32 %v507, %v496
        %v509 = vadd.f32 %v508, %v498
        %v510 = vadd.f32 %v509, %v500
        %v511 = vadd.f32 %v510, %v502
        %v512 = vadd.f32 %v511, %v504
        %v513 = vadd.f32 %v512, %v506
        %v514 = vrot.slane %v513, 4
        %v515 = vadd.f32 %v513, %v514
        %v516 = vrot.slane %v515, 2
        %v517 = vadd.f32 %v515, %v516
        %v518 = vrot.slane %v517, 1
        %v519 = vadd.f32 %v517, %v518
        %v520 = vld [vmem:[%s3] sm:$0xff]
        %v521 = vld [vmem:[%s3 + $0x8] sm:$0xff]
        %v522 = vld [vmem:[%s3 + $0x10] sm:$0xff]
        %v523 = vld [vmem:[%s3 + $0x18] sm:$0xff]
        %vm524 = vcmask 523264
        %v526 = vsel %vm524, %v520, 0
        %v529 = vsel %vm524, %v521, 0
        %v532 = vsel %vm524, %v522, 0
        %v535 = vsel %vm524, %v523, 0
        %537 = vmatprep.subr.mxu0 0.0
        %538 = vmatpush1.msra.mxu0 %v492
        %539 = vmatprep.subr.mxu0 0.0
        %540 = vmatpush1.msra.mxu0 %v494
        %541 = vmatprep.subr.mxu0 0.0
        %542 = vmatpush1.msra.mxu0 %v496
        %543 = vmatprep.subr.mxu0 0.0
        %544 = vmatpush1.msra.mxu0 %v498
        %545 = vmatprep.subr.mxu0 0.0
        %546 = vmatpush1.msra.mxu0 %v500
        %547 = vmatprep.subr.mxu0 0.0
        %548 = vmatpush1.msra.mxu0 %v502
        %549 = vmatprep.subr.mxu0 0.0
        %550 = vmatpush1.msra.mxu0 %v504
        %551 = vmatprep.subr.mxu0 0.0
        %552 = vmatpush1.msra.mxu0 %v506
        %553 = vmatprep.subr.mxu0 0.0
        %554 = vmatpush1.msra.mxu0 0.0
        %555 = vmatprep.subr.mxu0 0.0
        %556 = vmatpush1.msra.mxu0 0.0
        %557 = vmatprep.subr.mxu0 0.0
        %558 = vmatpush1.msra.mxu0 0.0
        %559 = vmatprep.subr.mxu0 0.0
        %560 = vmatpush1.msra.mxu0 0.0
        %561 = vmatprep.subr.mxu0 0.0
        %562 = vmatpush1.msra.mxu0 0.0
        %563 = vmatprep.subr.mxu0 0.0
        %564 = vmatpush1.msra.mxu0 0.0
        %565 = vmatprep.subr.mxu0 0.0
        %566 = vmatpush1.msra.mxu0 0.0
        %567 = vmatprep.subr.mxu0 0.0
        %568 = vmatpush1.msra.mxu0 0.0
        %569 = vmatprep.subr.mxu0 0.0
        %570 = vmatpush1.msra.mxu0 0.0
        %571 = vmatprep.subr.mxu0 0.0
        %572 = vmatpush1.msra.mxu0 0.0
        %573 = vmatprep.subr.mxu0 0.0
        %574 = vmatpush1.msra.mxu0 0.0
        %575 = vmatprep.subr.mxu0 0.0
        %576 = vmatpush1.msra.mxu0 0.0
        %577 = vmatprep.subr.mxu0 0.0
        %578 = vmatpush1.msra.mxu0 0.0
        %579 = vmatprep.subr.mxu0 0.0
        %580 = vmatpush1.msra.mxu0 0.0
        %581 = vmatprep.subr.mxu0 0.0
        %582 = vmatpush1.msra.mxu0 0.0
        %583 = vmatprep.subr.mxu0 0.0
        %584 = vmatpush1.msra.mxu0 0.0
        %585 = vmatprep.subr.mxu0 0.0
        %586 = vmatpush1.msra.mxu0 0.0
        %587 = vmatprep.subr.mxu0 0.0
        %588 = vmatpush1.msra.mxu0 0.0
        %589 = vmatprep.subr.mxu0 0.0
        %590 = vmatpush1.msra.mxu0 0.0
        %591 = vmatprep.subr.mxu0 0.0
        %592 = vmatpush1.msra.mxu0 0.0
        %593 = vmatprep.subr.mxu0 0.0
        %594 = vmatpush1.msra.mxu0 0.0
        %595 = vmatprep.subr.mxu0 0.0
        %596 = vmatpush1.msra.mxu0 0.0
        %597 = vmatprep.subr.mxu0 0.0
        %598 = vmatpush1.msra.mxu0 0.0
        %599 = vmatprep.subr.mxu0 0.0
        %600 = vmatpush1.msra.mxu0 0.0
        %601 = vmatprep.mubr.f32.mxu0 0.0
        %602 = vmatmul.mubr.f32.gmra.mrb[0].mxu0 %v526
        %v603 = vpop.f32.mrb[0].mxu0
        %v604 = vadd.f32 0.0, %v603
        %v605 = vpop.f32.mrb[0].mxu0
        %606 = vmatprep.mubr.f32.mxu0 0.0
        %607 = vmatmul.mubr.f32.gmra.mrb[0].mxu0 %v529
        %v608 = vpop.f32.mrb[0].mxu0
        %v609 = vadd.f32 0.0, %v608
        %v610 = vpop.f32.mrb[0].mxu0
        %611 = vmatprep.mubr.f32.mxu0 0.0
        %612 = vmatmul.mubr.f32.gmra.mrb[0].mxu0 %v532
        %v613 = vpop.f32.mrb[0].mxu0
        %v614 = vadd.f32 0.0, %v613
        %v615 = vpop.f32.mrb[0].mxu0
        %616 = vmatprep.mubr.f32.mxu0 0.0
        %617 = vmatmul.mubr.f32.gmra.mrb[0].mxu0 %v535
        %v618 = vpop.f32.mrb[0].mxu0
        %v619 = vadd.f32 0.0, %v618
        %v620 = vpop.f32.mrb[0].mxu0
        %621 = vdwg.mxu0
        %v622 = vrcp.pop %v519
        %v623 = vmul.f32 %v604, %v622
        %v624 = vmul.f32 %v609, %v622
        %v625 = vmul.f32 %v614, %v622
        %v626 = vmul.f32 %v619, %v622
        %v627 = vld [vmem:[%s279] sm:$0xff]
        %v628 = vld [vmem:[%s279 + $0x8] sm:$0xff]
        %v629 = vld [vmem:[%s279 + $0x10] sm:$0xff]
        %v630 = vld [vmem:[%s279 + $0x18] sm:$0xff]
        %632 = vset.pattern.permute.xlu0 0
        %633 = vperm.xlu0 %632, %v627
        %v634 = vpop.permute.xlu0 %633
        %637 = vset.pattern.permute.xlu0 0
        %638 = vperm.xlu0 %637, %v628
        %v639 = vpop.permute.xlu0 %638
        %642 = vset.pattern.permute.xlu0 0
        %643 = vperm.xlu0 %642, %v629
        %v644 = vpop.permute.xlu0 %643
        %647 = vset.pattern.permute.xlu0 0
        %648 = vperm.xlu0 %647, %v630
        %v649 = vpop.permute.xlu0 %648
        %v651 = vadd.f32 %v623, %v634
        %v652 = vadd.f32 %v624, %v639
        %v653 = vadd.f32 %v625, %v644
        %v654 = vadd.f32 %v626, %v649
        %655 = vst [vmem:[%s274] sm:$0xff] %v651
        %656 = vst [vmem:[%s274 + $0x8] sm:$0xff] %v652
        %657 = vst [vmem:[%s274 + $0x10] sm:$0xff] %v653
        %658 = vst [vmem:[%s274 + $0x18] sm:$0xff] %v654
        %s659 = sand.u32 %s161, 1
        %s660 = scalar_lea.sflag [#allocation4], %s659
        %s661 = sand.u32 %s161, 1
        %s662 = smul.addr %s661, 32
        %s663 = scalar_lea.vmem [#allocation5], %s662
        // Predicated region
        $region45: #{tpu_custom_call.1} parent=39 // pred_check
          %p664 = pneg %p171
        $region46: #{tpu_custom_call.1} parent=39 // pred_check_branch
          %666 = sbr.rel (%p664) target = $region48
        $region47: #{tpu_custom_call.1} parent=39 // pred_region
          %s668 = ssub.s32 512, 512
          %669 = vsyncadd %s660, %s668
          %s670 = smul.addr %s26, 16
          %s671 = sadd.s32 %s27, %s670
          %s672 = smul.addr %s671, 128
          %s673 = scalar_lea.hbm %s5, %s672
          %s674 = sshll.u32 %s663, 4
          %s675 = int_to_ptr.vmem [resolvable:$true] %s674
          %680 = dma.vmem_to_hbm [thread:$0]  %s675, 512, %s673, %s660, 128, 512, 8
        $region48: #{tpu_custom_call.1} parent=39 // pred_fallthru
          _
      $region40: #{tpu_custom_call.1} parent=5 // pred_fallthru
        _
      %p681 = scmp.le.s32.totalorder 2, %s17
      // Predicated region
      $region49: #{tpu_custom_call.1} parent=5 // pred_check
        %p682 = pneg %p681
      $region50: #{tpu_custom_call.1} parent=5 // pred_check_branch
        %684 = sbr.rel (%p682) target = $region52
      $region51: #{tpu_custom_call.1} parent=5 // pred_region
        %s685 = ssub.s32 %s17, 2
        // Predicated region
        $region53: #{tpu_custom_call.1} parent=51 // pred_check
          %p686 = pneg %p177
        $region54: #{tpu_custom_call.1} parent=51 // pred_check_branch
          %688 = sbr.rel (%p686) target = $region56
        $region55: #{tpu_custom_call.1} parent=51 // pred_region
          %s689 = sand.u32 %s162, 1
          %s690 = scalar_lea.sflag [#allocation4], %s689
          %s691 = sand.u32 %s162, 1
          %s692 = smul.addr %s691, 32
          %s693 = scalar_lea.vmem [#allocation5], %s692
          %694 = dma.done %s690, 512
        $region56: #{tpu_custom_call.1} parent=51 // pred_fallthru
          _
      $region52: #{tpu_custom_call.1} parent=5 // pred_fallthru
        _
    $region6: #{tpu_custom_call.1} parent=1 // loop_footer
      %s21 = sadd.s32 1, %s17
    $region7: #{tpu_custom_call.1} parent=1 // loop_footer_branch
      %16 = sbr.rel target = $region3
    $region8: #{tpu_custom_call.1} parent=1 // loop_exit
      _
    %695 = vsyncpa [#allocation3], 1
    %s696 = scalar_lea.sflag [#allocation3], 1
    %697 = vsyncpa %s696, 1
    %698 = vsyncpa [#allocation4], 1
    %s699 = scalar_lea.sflag [#allocation4], 1
    %700 = vsyncpa %s699, 1

</llo_original>
